<compile_context>
chip_gen: v6e
topology: v6e:2x2x1
jax: 0.10.0
libtpu: 0.0.40
codegen_flags: <defaults>
</compile_context>

<pallas_src>
import functools

import jax
import jax.numpy as jnp
from jax.experimental import pallas as pl
from jax.experimental.pallas import tpu as pltpu

INPUT_NODE_CNT = 784
MIDDLE_NODE_CNT = 512
OUTPUT_NODE_CNT = 10
LANE = 128                       # lane-padded width of layer 2 / output
DEFAULT_TB = 2048                # batch-tile rows per grid step
VMEM_LIMIT_BYTES = 40 * 1024 * 1024


def _round_up(n, m):
    return ((n + m - 1) // m) * m


def mlp_kernel(x_ref, w1_ref, b1_ref, w2_ref, b2_ref, o_ref):
    # fm: Linear(784 -> 512) + ReLU.  bf16 MXU operands, f32 accumulation.
    x = x_ref[...].astype(jnp.bfloat16)              # no-op if x is already bf16
    h = jnp.dot(x, w1_ref[...], preferred_element_type=jnp.float32)
    h = jnp.maximum(h + b1_ref[...], 0.0)            # f32 bias/ReLU on VPU
    # fo: Linear(512 -> 128 lane-padded) + ReLU; unmasked lane-dense bf16 store.
    y = jnp.dot(h.astype(jnp.bfloat16), w2_ref[...],
                preferred_element_type=jnp.float32)
    o_ref[...] = jnp.maximum(y + b2_ref[...], 0.0).astype(o_ref.dtype)


@functools.partial(jax.jit, static_argnames=("tb",))
def mlp_forward(x, w1_bf16, b1, w2_pad_bf16, b2_pad, *, tb=DEFAULT_TB):
    """x: (B, 784) f32 or bf16; w1: (784, 512) bf16; b1: (1, 512) f32;
    w2: (512, 128) bf16 (cols 10..127 zero); b2: (1, 128) f32 (cols 10.. zero).
    Returns (B, 10) f32."""
    B = x.shape[0]
    TB = min(tb, _round_up(B, 16))        # multiple of 16 (bf16 output sublanes)
    grid = (pl.cdiv(B, TB),)              # partial last block handled by Pallas

    flops = 2 * B * (INPUT_NODE_CNT * MIDDLE_NODE_CNT + MIDDLE_NODE_CNT * LANE)
    bytes_accessed = (
        B * INPUT_NODE_CNT * x.dtype.itemsize          # x in
        + B * LANE * 2                                 # out (bf16)
        + INPUT_NODE_CNT * MIDDLE_NODE_CNT * 2         # w1 (bf16)
        + MIDDLE_NODE_CNT * LANE * 2                   # w2 (bf16)
        + (MIDDLE_NODE_CNT + LANE) * 4)                # biases (f32)

    out = pl.pallas_call(
        mlp_kernel,
        out_shape=jax.ShapeDtypeStruct((B, LANE), jnp.bfloat16),
        grid=grid,
        in_specs=[
            pl.BlockSpec((TB, INPUT_NODE_CNT), lambda i: (i, 0)),
            pl.BlockSpec((INPUT_NODE_CNT, MIDDLE_NODE_CNT), lambda i: (0, 0)),
            pl.BlockSpec((1, MIDDLE_NODE_CNT), lambda i: (0, 0)),
            pl.BlockSpec((MIDDLE_NODE_CNT, LANE), lambda i: (0, 0)),
            pl.BlockSpec((1, LANE), lambda i: (0, 0)),
        ],
        out_specs=pl.BlockSpec((TB, LANE), lambda i: (i, 0)),
        compiler_params=pltpu.CompilerParams(
            dimension_semantics=("parallel",),
            vmem_limit_bytes=VMEM_LIMIT_BYTES),
        cost_estimate=pl.CostEstimate(
            flops=flops, transcendentals=0, bytes_accessed=bytes_accessed),
    )(x, w1_bf16, b1, w2_pad_bf16, b2_pad)
    # Column slice + cast fused into the jitted wrapper (bf16 halves its traffic).
    return out[:, :OUTPUT_NODE_CNT].astype(jnp.float32)


def init_params(key):
    """nn.Linear-style init, weights stored transposed as (in, out), f32."""
    k1, k2, k3, k4 = jax.random.split(key, 4)
    bound1 = 1.0 / jnp.sqrt(float(INPUT_NODE_CNT))
    bound2 = 1.0 / jnp.sqrt(float(MIDDLE_NODE_CNT))
    w1 = jax.random.uniform(k1, (INPUT_NODE_CNT, MIDDLE_NODE_CNT), jnp.float32,
                            -bound1, bound1)
    b1 = jax.random.uniform(k2, (1, MIDDLE_NODE_CNT), jnp.float32, -bound1, bound1)
    w2 = jax.random.uniform(k3, (MIDDLE_NODE_CNT, OUTPUT_NODE_CNT), jnp.float32,
                            -bound2, bound2)
    b2 = jax.random.uniform(k4, (1, OUTPUT_NODE_CNT), jnp.float32, -bound2, bound2)
    return w1, b1, w2, b2


def prepare_params(w1, b1, w2, b2):
    """One-time (init-time) cast to bf16 and lane-padding of the second layer."""
    w1b = w1.astype(jnp.bfloat16)
    w2p = jnp.pad(w2, ((0, 0), (0, LANE - OUTPUT_NODE_CNT))).astype(jnp.bfloat16)
    b2p = jnp.pad(b2, ((0, 0), (0, LANE - OUTPUT_NODE_CNT)))
    return w1b, b1, w2p, b2p


def _ref_bf16(x, w1, b1, w2, b2):
    """Reference with the same bf16-operand / f32-accumulate contract."""
    h = jnp.maximum(
        jnp.dot(x.astype(jnp.bfloat16), w1.astype(jnp.bfloat16),
                preferred_element_type=jnp.float32) + b1, 0.0)
    return jnp.maximum(
        jnp.dot(h.astype(jnp.bfloat16), w2.astype(jnp.bfloat16),
                preferred_element_type=jnp.float32) + b2, 0.0)


if __name__ == "__main__":
    key = jax.random.PRNGKey(0)
    kx, kp = jax.random.split(key)
    w1, b1, w2, b2 = init_params(kp)
    w1b, b1f, w2p, b2p = prepare_params(w1, b1, w2, b2)

    # Two small batches: one tile-aligned, one ragged (exercises the
    # partial-last-block path that replaced the host-side jnp.pad).
    for B in (32, 19):
        x = jax.random.normal(jax.random.fold_in(kx, B),
                              (B, INPUT_NODE_CNT), jnp.float32)
        out = jax.block_until_ready(mlp_forward(x, w1b, b1f, w2p, b2p))
        assert out.shape == (B, OUTPUT_NODE_CNT)
        assert out.dtype == jnp.float32

        # Check vs bf16-contract reference (kernel also rounds output to bf16).
        ref = _ref_bf16(x, w1, b1, w2, b2)
        assert jnp.allclose(out, ref, atol=2e-2, rtol=2e-2), \
            f"mismatch vs bf16 reference (B={B})"

        # Loose sanity check vs the full-f32 PyTorch-equivalent forward.
        ref_f32 = jnp.maximum(jnp.maximum(x @ w1 + b1, 0.0) @ w2 + b2, 0.0)
        assert jnp.allclose(out, ref_f32, atol=6e-2, rtol=6e-2), \
            f"mismatch vs f32 reference (B={B})"

    print("KERNEL_OK")
</pallas_src>

<mosaic_0001>
module attributes {stable_mosaic.version = 11 : i64} {
  func.func @mlp_kernel(%arg0: i32, %arg1: memref<32x784xf32, #tpu.memory_space<vmem>>, %arg2: memref<784x512xbf16, #tpu.memory_space<vmem>>, %arg3: memref<1x512xf32, #tpu.memory_space<vmem>>, %arg4: memref<512x128xbf16, #tpu.memory_space<vmem>>, %arg5: memref<1x128xf32, #tpu.memory_space<vmem>>, %arg6: memref<32x128xbf16, #tpu.memory_space<vmem>>) attributes {dimension_semantics = [#tpu.dimension_semantics<parallel>], iteration_bounds = array<i64: 1>, scalar_prefetch = 0 : i64, scratch_operands = 0 : i64, tpu.core_type = #tpu.core_type<tc>, window_params = [{transform_indices = @transform_0, window_bounds = array<i64: 32, 784>}, {pipeline_mode = #tpu.pipeline_mode<synchronous>, transform_indices = @transform_1, window_bounds = array<i64: 784, 512>}, {pipeline_mode = #tpu.pipeline_mode<synchronous>, transform_indices = @transform_2, window_bounds = array<i64: 1, 512>}, {pipeline_mode = #tpu.pipeline_mode<synchronous>, transform_indices = @transform_3, window_bounds = array<i64: 512, 128>}, {pipeline_mode = #tpu.pipeline_mode<synchronous>, transform_indices = @transform_4, window_bounds = array<i64: 1, 128>}, {transform_indices = @transform_5, window_bounds = array<i64: 32, 128>}]} {
    %c0 = arith.constant 0 : index
    %c0_0 = arith.constant 0 : index
    %0 = vector.load %arg1[%c0, %c0_0] : memref<32x784xf32, #tpu.memory_space<vmem>>, vector<32x784xf32>
    %1 = arith.truncf %0 : vector<32x784xf32> to vector<32x784xbf16>
    %c0_1 = arith.constant 0 : index
    %c0_2 = arith.constant 0 : index
    %2 = vector.load %arg2[%c0_1, %c0_2] : memref<784x512xbf16, #tpu.memory_space<vmem>>, vector<784x512xbf16>
    %cst = arith.constant dense<0.000000e+00> : vector<32x512xf32>
    %3 = tpu.matmul %1, %2, %cst {dimension_numbers = #tpu.dot_dimension_numbers<[1], [0], [0], [1], [0, 0, 1, 1], [], []>} : vector<32x784xbf16>, vector<784x512xbf16>, vector<32x512xf32> -> vector<32x512xf32>
    %c0_3 = arith.constant 0 : index
    %c0_4 = arith.constant 0 : index
    %4 = vector.load %arg3[%c0_3, %c0_4] : memref<1x512xf32, #tpu.memory_space<vmem>>, vector<1x512xf32>
    %5 = vector.broadcast %4 : vector<1x512xf32> to vector<32x512xf32>
    %6 = arith.addf %3, %5 : vector<32x512xf32>
    %cst_5 = arith.constant 0.000000e+00 : f32
    %7 = vector.broadcast %cst_5 : f32 to vector<32x512xf32>
    %8 = arith.maximumf %6, %7 : vector<32x512xf32>
    %9 = arith.truncf %8 : vector<32x512xf32> to vector<32x512xbf16>
    %c0_6 = arith.constant 0 : index
    %c0_7 = arith.constant 0 : index
    %10 = vector.load %arg4[%c0_6, %c0_7] : memref<512x128xbf16, #tpu.memory_space<vmem>>, vector<512x128xbf16>
    %cst_8 = arith.constant dense<0.000000e+00> : vector<32x128xf32>
    %11 = tpu.matmul %9, %10, %cst_8 {dimension_numbers = #tpu.dot_dimension_numbers<[1], [0], [0], [1], [0, 0, 1, 1], [], []>} : vector<32x512xbf16>, vector<512x128xbf16>, vector<32x128xf32> -> vector<32x128xf32>
    %c0_9 = arith.constant 0 : index
    %c0_10 = arith.constant 0 : index
    %12 = vector.load %arg5[%c0_9, %c0_10] : memref<1x128xf32, #tpu.memory_space<vmem>>, vector<1x128xf32>
    %13 = vector.broadcast %12 : vector<1x128xf32> to vector<32x128xf32>
    %14 = arith.addf %11, %13 : vector<32x128xf32>
    %cst_11 = arith.constant 0.000000e+00 : f32
    %15 = vector.broadcast %cst_11 : f32 to vector<32x128xf32>
    %16 = arith.maximumf %14, %15 : vector<32x128xf32>
    %17 = arith.truncf %16 : vector<32x128xf32> to vector<32x128xbf16>
    %c0_12 = arith.constant 0 : index
    %c0_13 = arith.constant 0 : index
    %18 = vector.load %arg6[%c0_12, %c0_13] : memref<32x128xbf16, #tpu.memory_space<vmem>>, vector<32x128xbf16>
    tpu.vector_store %arg6[%c0_12, %c0_13], %17 {strides = array<i32>} : memref<32x128xbf16, #tpu.memory_space<vmem>>, vector<32x128xbf16>,
    return
  }
  func.func @transform_0(%arg0: i32) -> (i32, i32) {
    %c0_i32 = arith.constant 0 : i32
    %c0_i32_0 = arith.constant 0 : i32
    return %arg0, %c0_i32 : i32, i32
  }
  func.func @transform_1(%arg0: i32) -> (i32, i32) {
    %c0_i32 = arith.constant 0 : i32
    %c0_i32_0 = arith.constant 0 : i32
    %c0_i32_1 = arith.constant 0 : i32
    return %c0_i32, %c0_i32_0 : i32, i32
  }
  func.func @transform_2(%arg0: i32) -> (i32, i32) {
    %c0_i32 = arith.constant 0 : i32
    %c0_i32_0 = arith.constant 0 : i32
    %c0_i32_1 = arith.constant 0 : i32
    return %c0_i32, %c0_i32_0 : i32, i32
  }
  func.func @transform_3(%arg0: i32) -> (i32, i32) {
    %c0_i32 = arith.constant 0 : i32
    %c0_i32_0 = arith.constant 0 : i32
    %c0_i32_1 = arith.constant 0 : i32
    return %c0_i32, %c0_i32_0 : i32, i32
  }
  func.func @transform_4(%arg0: i32) -> (i32, i32) {
    %c0_i32 = arith.constant 0 : i32
    %c0_i32_0 = arith.constant 0 : i32
    %c0_i32_1 = arith.constant 0 : i32
    return %c0_i32, %c0_i32_0 : i32, i32
  }
  func.func @transform_5(%arg0: i32) -> (i32, i32) {
    %c0_i32 = arith.constant 0 : i32
    %c0_i32_0 = arith.constant 0 : i32
    return %arg0, %c0_i32 : i32, i32
  }
}

</mosaic_0001>

<llo_original>
// kernel: mlp_forward.1
$region0: #{mlp_forward.1}
  #allocation0 [shape = 'u32[]', space=smem, size = 0x4, offset = 0x4, fixed_abs, tag = 'smem constant byte address 0x4 - core index']
  #allocation1 [shape = 'u32[144,128]{1,0:T(1,128)}', space=vmem, size = 0x12000, scoped, tag = 'internal scratch']
  %s0 = inlined_call_operand.hbm [shape: f32[32,784], index: 0, kind: input, shape index: {}]
  %s1 = inlined_call_operand.hbm [shape: bf16[784,512], index: 1, kind: input, shape index: {}]
  %s2 = inlined_call_operand.hbm [shape: f32[1,512], index: 2, kind: input, shape index: {}]
  %s3 = inlined_call_operand.hbm [shape: bf16[512,128], index: 3, kind: input, shape index: {}]
  %s4 = inlined_call_operand.vmem [shape: f32[1,128], index: 4, kind: input, shape index: {}]
  %s5 = inlined_call_operand.vmem [shape: bf16[32,128], index: 5, kind: output, shape index: {}]
  %s6 = sld [smem:[#allocation0]]
  $region46: #{mlp_forward.1} parent=0
    _
  %s8 = ssub.s32 1, %s6
  %s9 = scalar_select 0, %s8, %s6
  $region1: #{mlp_forward.1} parent=0
    #allocation2 [shape = 'u8[114688]{0}', space=vmem, size = 0x1c000, scoped, tag = 'input window, operand 0, single buffered']
    #allocation3 [shape = 's32[1]{0}', space=sflag, size = 0x4, scoped, tag = 'scoped memory for mlp_forward.1']
    #allocation4 [shape = 'u8[802816]{0}', space=vmem, size = 0xc4000, scoped, tag = 'input window, operand 1, single buffered']
    #allocation5 [shape = 's32[1]{0}', space=sflag, size = 0x4, scoped, tag = 'scoped memory for mlp_forward.1']
    #allocation6 [shape = 'u8[2048]{0}', space=vmem, size = 0x800, scoped, tag = 'input window, operand 2, single buffered']
    #allocation7 [shape = 'u8[131072]{0}', space=vmem, size = 0x20000, scoped, tag = 'input window, operand 3, single buffered']
    #allocation8 [shape = 's32[1]{0}', space=sflag, size = 0x4, scoped, tag = 'scoped memory for mlp_forward.1']
    %10 = vsyncpa [#allocation3], 0
    %11 = vsyncpa [#allocation5], 0
    %12 = vsyncpa [#allocation8], 0
    // Predicated region
    $region2: #{mlp_forward.1} parent=1 // pred_check
      _
    $region3: #{mlp_forward.1} parent=1 // pred_check_branch
      %14 = sbr.rel (0) target = $region5
    $region4: #{mlp_forward.1} parent=1 // pred_region
      %s16 = ssub.s32 3584, 3584
      %17 = vsyncadd [#allocation3], %s16
      %s18 = sshll.u32 [#allocation2], 4
      %s19 = int_to_ptr.vmem [resolvable:$true] %s18
      %24 = dma.hbm_to_vmem [thread:$0]  %s0, 3584, %s19, [#allocation3], 896, 896, 56
    $region5: #{mlp_forward.1} parent=1 // pred_fallthru
      _
    // Predicated region
    $region6: #{mlp_forward.1} parent=1 // pred_check
      _
    $region7: #{mlp_forward.1} parent=1 // pred_check_branch
      %26 = sbr.rel (0) target = $region9
    $region8: #{mlp_forward.1} parent=1 // pred_region
      %s28 = ssub.s32 25088, 25088
      %29 = vsyncadd [#allocation5], %s28
      %s30 = sshll.u32 [#allocation4], 4
      %s31 = int_to_ptr.vmem [resolvable:$true] %s30
      %36 = dma.hbm_to_vmem [thread:$0]  %s1, 25088, %s31, [#allocation5], 256, 256, 16
    $region9: #{mlp_forward.1} parent=1 // pred_fallthru
      _
    // Predicated region
    $region10: #{mlp_forward.1} parent=1 // pred_check
      _
    $region11: #{mlp_forward.1} parent=1 // pred_check_branch
      %38 = sbr.rel (0) target = $region13
    $region12: #{mlp_forward.1} parent=1 // pred_region
      %s40 = ssub.s32 64, 64
      %41 = vsyncadd [#allocation5], %s40
      %s43 = sshll.u32 [#allocation6], 4
      %s44 = int_to_ptr.vmem [resolvable:$true] %s43
      %46 = dma.hbm_to_vmem [thread:$0]  %s2, 64, %s44, [#allocation5]
    $region13: #{mlp_forward.1} parent=1 // pred_fallthru
      _
    // Predicated region
    $region14: #{mlp_forward.1} parent=1 // pred_check
      _
    $region15: #{mlp_forward.1} parent=1 // pred_check_branch
      %48 = sbr.rel (0) target = $region17
    $region16: #{mlp_forward.1} parent=1 // pred_region
      %s50 = ssub.s32 4096, 4096
      %51 = vsyncadd [#allocation8], %s50
      %s52 = sshll.u32 [#allocation7], 4
      %s53 = int_to_ptr.vmem [resolvable:$true] %s52
      %58 = dma.hbm_to_vmem [thread:$0]  %s3, 4096, %s53, [#allocation8], 64, 64, 4
    $region17: #{mlp_forward.1} parent=1 // pred_fallthru
      _
    // Predicated region
    $region18: #{mlp_forward.1} parent=1 // pred_check
      _
    $region19: #{mlp_forward.1} parent=1 // pred_check_branch
      %60 = sbr.rel (0) target = $region21
    $region20: #{mlp_forward.1} parent=1 // pred_region
      _
    $region21: #{mlp_forward.1} parent=1 // pred_fallthru
      _
    // Predicated region
    $region22: #{mlp_forward.1} parent=1 // pred_check
      _
    $region23: #{mlp_forward.1} parent=1 // pred_check_branch
      %62 = sbr.rel (0) target = $region25
    $region24: #{mlp_forward.1} parent=1 // pred_region
      %63 = dma.done [#allocation3], 3584
    $region25: #{mlp_forward.1} parent=1 // pred_fallthru
      _
    // Predicated region
    $region26: #{mlp_forward.1} parent=1 // pred_check
      _
    $region27: #{mlp_forward.1} parent=1 // pred_check_branch
      %65 = sbr.rel (0) target = $region29
    $region28: #{mlp_forward.1} parent=1 // pred_region
      %66 = dma.done [#allocation5], 25088
    $region29: #{mlp_forward.1} parent=1 // pred_fallthru
      _
    // Predicated region
    $region30: #{mlp_forward.1} parent=1 // pred_check
      _
    $region31: #{mlp_forward.1} parent=1 // pred_check_branch
      %68 = sbr.rel (0) target = $region33
    $region32: #{mlp_forward.1} parent=1 // pred_region
      %69 = dma.done [#allocation5], 64
    $region33: #{mlp_forward.1} parent=1 // pred_fallthru
      _
    // Predicated region
    $region34: #{mlp_forward.1} parent=1 // pred_check
      _
    $region35: #{mlp_forward.1} parent=1 // pred_check_branch
      %71 = sbr.rel (0) target = $region37
    $region36: #{mlp_forward.1} parent=1 // pred_region
      %72 = dma.done [#allocation8], 4096
    $region37: #{mlp_forward.1} parent=1 // pred_fallthru
      _
    %v74 = vld [vmem:[#allocation2] sm:$0xff]
    %v75 = vld [vmem:[#allocation2 + $0x8] sm:$0xff]
    %v76 = vld [vmem:[#allocation2 + $0x10] sm:$0xff]
    %v77 = vld [vmem:[#allocation2 + $0x18] sm:$0xff]
    %v78 = vld [vmem:[#allocation2 + $0x20] sm:$0xff]
    %v79 = vld [vmem:[#allocation2 + $0x28] sm:$0xff]
    %v80 = vld [vmem:[#allocation2 + $0x30] sm:$0xff]
    %v81 = vld [vmem:[#allocation2 + $0x38] sm:$0xff]
    %v82 = vld [vmem:[#allocation2 + $0x40] sm:$0xff]
    %v83 = vld [vmem:[#allocation2 + $0x48] sm:$0xff]
    %v84 = vld [vmem:[#allocation2 + $0x50] sm:$0xff]
    %v85 = vld [vmem:[#allocation2 + $0x58] sm:$0xff]
    %v86 = vld [vmem:[#allocation2 + $0x60] sm:$0xff]
    %v87 = vld [vmem:[#allocation2 + $0x68] sm:$0xff]
    %v88 = vld [vmem:[#allocation2 + $0x70] sm:$0xff]
    %v89 = vld [vmem:[#allocation2 + $0x78] sm:$0xff]
    %v90 = vld [vmem:[#allocation2 + $0x80] sm:$0xff]
    %v91 = vld [vmem:[#allocation2 + $0x88] sm:$0xff]
    %v92 = vld [vmem:[#allocation2 + $0x90] sm:$0xff]
    %v93 = vld [vmem:[#allocation2 + $0x98] sm:$0xff]
    %v94 = vld [vmem:[#allocation2 + $0xa0] sm:$0xff]
    %v95 = vld [vmem:[#allocation2 + $0xa8] sm:$0xff]
    %v96 = vld [vmem:[#allocation2 + $0xb0] sm:$0xff]
    %v97 = vld [vmem:[#allocation2 + $0xb8] sm:$0xff]
    %v98 = vld [vmem:[#allocation2 + $0xc0] sm:$0xff]
    %v99 = vld [vmem:[#allocation2 + $0xc8] sm:$0xff]
    %v100 = vld [vmem:[#allocation2 + $0xd0] sm:$0xff]
    %v101 = vld [vmem:[#allocation2 + $0xd8] sm:$0xff]
    %v102 = vpack.c.bf16 %v81, %v74
    %v103 = vpack.c.bf16 %v82, %v75
    %v104 = vpack.c.bf16 %v83, %v76
    %v105 = vpack.c.bf16 %v84, %v77
    %v106 = vpack.c.bf16 %v85, %v78
    %v107 = vpack.c.bf16 %v86, %v79
    %v108 = vpack.c.bf16 %v87, %v80
    %v109 = vpack.c.bf16 %v95, %v88
    %v110 = vpack.c.bf16 %v96, %v89
    %v111 = vpack.c.bf16 %v97, %v90
    %v112 = vpack.c.bf16 %v98, %v91
    %v113 = vpack.c.bf16 %v99, %v92
    %v114 = vpack.c.bf16 %v100, %v93
    %v115 = vpack.c.bf16 %v101, %v94
    %v116 = vld [vmem:[#allocation4] sm:$0xff]
    %v117 = vld [vmem:[#allocation4 + $0x8] sm:$0xff]
    %v118 = vld [vmem:[#allocation4 + $0x10] sm:$0xff]
    %v119 = vld [vmem:[#allocation4 + $0x18] sm:$0xff]
    %v120 = vld [vmem:[#allocation4 + $0x20] sm:$0xff]
    %v121 = vld [vmem:[#allocation4 + $0x28] sm:$0xff]
    %v122 = vld [vmem:[#allocation4 + $0x30] sm:$0xff]
    %v123 = vld [vmem:[#allocation4 + $0x38] sm:$0xff]
    %v124 = vld [vmem:[#allocation4 + $0x40] sm:$0xff]
    %v125 = vld [vmem:[#allocation4 + $0x48] sm:$0xff]
    %v126 = vld [vmem:[#allocation4 + $0x50] sm:$0xff]
    %v127 = vld [vmem:[#allocation4 + $0x58] sm:$0xff]
    %v128 = vld [vmem:[#allocation4 + $0x60] sm:$0xff]
    %v129 = vld [vmem:[#allocation4 + $0x68] sm:$0xff]
    %v130 = vld [vmem:[#allocation4 + $0x70] sm:$0xff]
    %v131 = vld [vmem:[#allocation4 + $0x78] sm:$0xff]
    %v132 = vld [vmem:[#allocation4 + $0x80] sm:$0xff]
    %v133 = vld [vmem:[#allocation4 + $0x88] sm:$0xff]
    %v134 = vld [vmem:[#allocation4 + $0x90] sm:$0xff]
    %v135 = vld [vmem:[#allocation4 + $0x98] sm:$0xff]
    %v136 = vld [vmem:[#allocation4 + $0xa0] sm:$0xff]
    %v137 = vld [vmem:[#allocation4 + $0xa8] sm:$0xff]
    %v138 = vld [vmem:[#allocation4 + $0xb0] sm:$0xff]
    %v139 = vld [vmem:[#allocation4 + $0xb8] sm:$0xff]
    %v140 = vld [vmem:[#allocation4 + $0xc0] sm:$0xff]
    %v141 = vld [vmem:[#allocation4 + $0xc8] sm:$0xff]
    %v142 = vld [vmem:[#allocation4 + $0xd0] sm:$0xff]
    %v143 = vld [vmem:[#allocation4 + $0xd8] sm:$0xff]
    %v144 = vld [vmem:[#allocation4 + $0xe0] sm:$0xff]
    %v145 = vld [vmem:[#allocation4 + $0xe8] sm:$0xff]
    %v146 = vld [vmem:[#allocation4 + $0xf0] sm:$0xff]
    %v147 = vld [vmem:[#allocation4 + $0xf8] sm:$0xff]
    %v148 = vld [vmem:[#allocation4 + $0x100] sm:$0xff]
    %v149 = vld [vmem:[#allocation4 + $0x108] sm:$0xff]
    %v150 = vld [vmem:[#allocation4 + $0x110] sm:$0xff]
    %v151 = vld [vmem:[#allocation4 + $0x118] sm:$0xff]
    %v152 = vld [vmem:[#allocation4 + $0x120] sm:$0xff]
    %v153 = vld [vmem:[#allocation4 + $0x128] sm:$0xff]
    %v154 = vld [vmem:[#allocation4 + $0x130] sm:$0xff]
    %v155 = vld [vmem:[#allocation4 + $0x138] sm:$0xff]
    %v156 = vld [vmem:[#allocation4 + $0x140] sm:$0xff]
    %v157 = vld [vmem:[#allocation4 + $0x148] sm:$0xff]
    %v158 = vld [vmem:[#allocation4 + $0x150] sm:$0xff]
    %v159 = vld [vmem:[#allocation4 + $0x158] sm:$0xff]
    %v160 = vld [vmem:[#allocation4 + $0x160] sm:$0xff]
    %v161 = vld [vmem:[#allocation4 + $0x168] sm:$0xff]
    %v162 = vld [vmem:[#allocation4 + $0x170] sm:$0xff]
    %v163 = vld [vmem:[#allocation4 + $0x178] sm:$0xff]
    %v164 = vld [vmem:[#allocation4 + $0x180] sm:$0xff]
    %v165 = vld [vmem:[#allocation4 + $0x188] sm:$0xff]
    %v166 = vld [vmem:[#allocation4 + $0x190] sm:$0xff]
    %v167 = vld [vmem:[#allocation4 + $0x198] sm:$0xff]
    %v168 = vld [vmem:[#allocation4 + $0x1a0] sm:$0xff]
    %v169 = vld [vmem:[#allocation4 + $0x1a8] sm:$0xff]
    %v170 = vld [vmem:[#allocation4 + $0x1b0] sm:$0xff]
    %v171 = vld [vmem:[#allocation4 + $0x1b8] sm:$0xff]
    %v172 = vld [vmem:[#allocation4 + $0x1c0] sm:$0xff]
    %v173 = vld [vmem:[#allocation4 + $0x1c8] sm:$0xff]
    %v174 = vld [vmem:[#allocation4 + $0x1d0] sm:$0xff]
    %v175 = vld [vmem:[#allocation4 + $0x1d8] sm:$0xff]
    %v176 = vld [vmem:[#allocation4 + $0x1e0] sm:$0xff]
    %v177 = vld [vmem:[#allocation4 + $0x1e8] sm:$0xff]
    %v178 = vld [vmem:[#allocation4 + $0x1f0] sm:$0xff]
    %v179 = vld [vmem:[#allocation4 + $0x1f8] sm:$0xff]
    %v180 = vld [vmem:[#allocation4 + $0x200] sm:$0xff]
    %v181 = vld [vmem:[#allocation4 + $0x208] sm:$0xff]
    %v182 = vld [vmem:[#allocation4 + $0x210] sm:$0xff]
    %v183 = vld [vmem:[#allocation4 + $0x218] sm:$0xff]
    %v184 = vld [vmem:[#allocation4 + $0x220] sm:$0xff]
    %v185 = vld [vmem:[#allocation4 + $0x228] sm:$0xff]
    %v186 = vld [vmem:[#allocation4 + $0x230] sm:$0xff]
    %v187 = vld [vmem:[#allocation4 + $0x238] sm:$0xff]
    %v188 = vld [vmem:[#allocation4 + $0x240] sm:$0xff]
    %v189 = vld [vmem:[#allocation4 + $0x248] sm:$0xff]
    %v190 = vld [vmem:[#allocation4 + $0x250] sm:$0xff]
    %v191 = vld [vmem:[#allocation4 + $0x258] sm:$0xff]
    %v192 = vld [vmem:[#allocation4 + $0x260] sm:$0xff]
    %v193 = vld [vmem:[#allocation4 + $0x268] sm:$0xff]
    %v194 = vld [vmem:[#allocation4 + $0x270] sm:$0xff]
    %v195 = vld [vmem:[#allocation4 + $0x278] sm:$0xff]
    %v196 = vld [vmem:[#allocation4 + $0x280] sm:$0xff]
    %v197 = vld [vmem:[#allocation4 + $0x288] sm:$0xff]
    %v198 = vld [vmem:[#allocation4 + $0x290] sm:$0xff]
    %v199 = vld [vmem:[#allocation4 + $0x298] sm:$0xff]
    %v200 = vld [vmem:[#allocation4 + $0x2a0] sm:$0xff]
    %v201 = vld [vmem:[#allocation4 + $0x2a8] sm:$0xff]
    %v202 = vld [vmem:[#allocation4 + $0x2b0] sm:$0xff]
    %v203 = vld [vmem:[#allocation4 + $0x2b8] sm:$0xff]
    %v204 = vld [vmem:[#allocation4 + $0x2c0] sm:$0xff]
    %v205 = vld [vmem:[#allocation4 + $0x2c8] sm:$0xff]
    %v206 = vld [vmem:[#allocation4 + $0x2d0] sm:$0xff]
    %v207 = vld [vmem:[#allocation4 + $0x2d8] sm:$0xff]
    %v208 = vld [vmem:[#allocation4 + $0x2e0] sm:$0xff]
    %v209 = vld [vmem:[#allocation4 + $0x2e8] sm:$0xff]
    %v210 = vld [vmem:[#allocation4 + $0x2f0] sm:$0xff]
    %v211 = vld [vmem:[#allocation4 + $0x2f8] sm:$0xff]
    %v212 = vld [vmem:[#allocation4 + $0x300] sm:$0xff]
    %v213 = vld [vmem:[#allocation4 + $0x308] sm:$0xff]
    %v214 = vld [vmem:[#allocation4 + $0x310] sm:$0xff]
    %v215 = vld [vmem:[#allocation4 + $0x318] sm:$0xff]
    %v216 = vld [vmem:[#allocation4 + $0x320] sm:$0xff]
    %v217 = vld [vmem:[#allocation4 + $0x328] sm:$0xff]
    %v218 = vld [vmem:[#allocation4 + $0x330] sm:$0xff]
    %v219 = vld [vmem:[#allocation4 + $0x338] sm:$0xff]
    %v220 = vld [vmem:[#allocation4 + $0x340] sm:$0xff]
    %v221 = vld [vmem:[#allocation4 + $0x348] sm:$0xff]
    %v222 = vld [vmem:[#allocation4 + $0x350] sm:$0xff]
    %v223 = vld [vmem:[#allocation4 + $0x358] sm:$0xff]
    %v224 = vld [vmem:[#allocation4 + $0x360] sm:$0xff]
    %v225 = vld [vmem:[#allocation4 + $0x368] sm:$0xff]
    %v226 = vld [vmem:[#allocation4 + $0x370] sm:$0xff]
    %v227 = vld [vmem:[#allocation4 + $0x378] sm:$0xff]
    %v228 = vld [vmem:[#allocation4 + $0x380] sm:$0xff]
    %v229 = vld [vmem:[#allocation4 + $0x388] sm:$0xff]
    %v230 = vld [vmem:[#allocation4 + $0x390] sm:$0xff]
    %v231 = vld [vmem:[#allocation4 + $0x398] sm:$0xff]
    %v232 = vld [vmem:[#allocation4 + $0x3a0] sm:$0xff]
    %v233 = vld [vmem:[#allocation4 + $0x3a8] sm:$0xff]
    %v234 = vld [vmem:[#allocation4 + $0x3b0] sm:$0xff]
    %v235 = vld [vmem:[#allocation4 + $0x3b8] sm:$0xff]
    %v236 = vld [vmem:[#allocation4 + $0x3c0] sm:$0xff]
    %v237 = vld [vmem:[#allocation4 + $0x3c8] sm:$0xff]
    %v238 = vld [vmem:[#allocation4 + $0x3d0] sm:$0xff]
    %v239 = vld [vmem:[#allocation4 + $0x3d8] sm:$0xff]
    %v240 = vld [vmem:[#allocation4 + $0x3e0] sm:$0xff]
    %v241 = vld [vmem:[#allocation4 + $0x3e8] sm:$0xff]
    %v242 = vld [vmem:[#allocation4 + $0x3f0] sm:$0xff]
    %v243 = vld [vmem:[#allocation4 + $0x3f8] sm:$0xff]
    %v244 = vld [vmem:[#allocation4 + $0x400] sm:$0xff]
    %v245 = vld [vmem:[#allocation4 + $0x408] sm:$0xff]
    %v246 = vld [vmem:[#allocation4 + $0x410] sm:$0xff]
    %v247 = vld [vmem:[#allocation4 + $0x418] sm:$0xff]
    %v248 = vld [vmem:[#allocation4 + $0x420] sm:$0xff]
    %v249 = vld [vmem:[#allocation4 + $0x428] sm:$0xff]
    %v250 = vld [vmem:[#allocation4 + $0x430] sm:$0xff]
    %v251 = vld [vmem:[#allocation4 + $0x438] sm:$0xff]
    %v252 = vld [vmem:[#allocation4 + $0x440] sm:$0xff]
    %v253 = vld [vmem:[#allocation4 + $0x448] sm:$0xff]
    %v254 = vld [vmem:[#allocation4 + $0x450] sm:$0xff]
    %v255 = vld [vmem:[#allocation4 + $0x458] sm:$0xff]
    %v256 = vld [vmem:[#allocation4 + $0x460] sm:$0xff]
    %v257 = vld [vmem:[#allocation4 + $0x468] sm:$0xff]
    %v258 = vld [vmem:[#allocation4 + $0x470] sm:$0xff]
    %v259 = vld [vmem:[#allocation4 + $0x478] sm:$0xff]
    %v260 = vld [vmem:[#allocation4 + $0x480] sm:$0xff]
    %v261 = vld [vmem:[#allocation4 + $0x488] sm:$0xff]
    %v262 = vld [vmem:[#allocation4 + $0x490] sm:$0xff]
    %v263 = vld [vmem:[#allocation4 + $0x498] sm:$0xff]
    %v264 = vld [vmem:[#allocation4 + $0x4a0] sm:$0xff]
    %v265 = vld [vmem:[#allocation4 + $0x4a8] sm:$0xff]
    %v266 = vld [vmem:[#allocation4 + $0x4b0] sm:$0xff]
    %v267 = vld [vmem:[#allocation4 + $0x4b8] sm:$0xff]
    %v268 = vld [vmem:[#allocation4 + $0x4c0] sm:$0xff]
    %v269 = vld [vmem:[#allocation4 + $0x4c8] sm:$0xff]
    %v270 = vld [vmem:[#allocation4 + $0x4d0] sm:$0xff]
    %v271 = vld [vmem:[#allocation4 + $0x4d8] sm:$0xff]
    %v272 = vld [vmem:[#allocation4 + $0x4e0] sm:$0xff]
    %v273 = vld [vmem:[#allocation4 + $0x4e8] sm:$0xff]
    %v274 = vld [vmem:[#allocation4 + $0x4f0] sm:$0xff]
    %v275 = vld [vmem:[#allocation4 + $0x4f8] sm:$0xff]
    %v276 = vld [vmem:[#allocation4 + $0x500] sm:$0xff]
    %v277 = vld [vmem:[#allocation4 + $0x508] sm:$0xff]
    %v278 = vld [vmem:[#allocation4 + $0x510] sm:$0xff]
    %v279 = vld [vmem:[#allocation4 + $0x518] sm:$0xff]
    %v280 = vld [vmem:[#allocation4 + $0x520] sm:$0xff]
    %v281 = vld [vmem:[#allocation4 + $0x528] sm:$0xff]
    %v282 = vld [vmem:[#allocation4 + $0x530] sm:$0xff]
    %v283 = vld [vmem:[#allocation4 + $0x538] sm:$0xff]
    %v284 = vld [vmem:[#allocation4 + $0x540] sm:$0xff]
    %v285 = vld [vmem:[#allocation4 + $0x548] sm:$0xff]
    %v286 = vld [vmem:[#allocation4 + $0x550] sm:$0xff]
    %v287 = vld [vmem:[#allocation4 + $0x558] sm:$0xff]
    %v288 = vld [vmem:[#allocation4 + $0x560] sm:$0xff]
    %v289 = vld [vmem:[#allocation4 + $0x568] sm:$0xff]
    %v290 = vld [vmem:[#allocation4 + $0x570] sm:$0xff]
    %v291 = vld [vmem:[#allocation4 + $0x578] sm:$0xff]
    %v292 = vld [vmem:[#allocation4 + $0x580] sm:$0xff]
    %v293 = vld [vmem:[#allocation4 + $0x588] sm:$0xff]
    %v294 = vld [vmem:[#allocation4 + $0x590] sm:$0xff]
    %v295 = vld [vmem:[#allocation4 + $0x598] sm:$0xff]
    %v296 = vld [vmem:[#allocation4 + $0x5a0] sm:$0xff]
    %v297 = vld [vmem:[#allocation4 + $0x5a8] sm:$0xff]
    %v298 = vld [vmem:[#allocation4 + $0x5b0] sm:$0xff]
    %v299 = vld [vmem:[#allocation4 + $0x5b8] sm:$0xff]
    %v300 = vld [vmem:[#allocation4 + $0x5c0] sm:$0xff]
    %v301 = vld [vmem:[#allocation4 + $0x5c8] sm:$0xff]
    %v302 = vld [vmem:[#allocation4 + $0x5d0] sm:$0xff]
    %v303 = vld [vmem:[#allocation4 + $0x5d8] sm:$0xff]
    %v304 = vld [vmem:[#allocation4 + $0x5e0] sm:$0xff]
    %v305 = vld [vmem:[#allocation4 + $0x5e8] sm:$0xff]
    %v306 = vld [vmem:[#allocation4 + $0x5f0] sm:$0xff]
    %v307 = vld [vmem:[#allocation4 + $0x5f8] sm:$0xff]
    %v308 = vld [vmem:[#allocation4 + $0x600] sm:$0xff]
    %v309 = vld [vmem:[#allocation4 + $0x608] sm:$0xff]
    %v310 = vld [vmem:[#allocation4 + $0x610] sm:$0xff]
    %v311 = vld [vmem:[#allocation4 + $0x618] sm:$0xff]
    %v312 = vld [vmem:[#allocation6] sm:$0xf]
    %v314 = vlaneseq
    %v315 = vshrl.u32 %v314, 7
    %v316 = vsub.s32 0, %v315
    %v317 = vrot.slane %v312, %v316
    %v318 = vlaneseq
    %v319 = vshrl.u32 %v318, 7
    %v320 = vsub.s32 1, %v319
    %v321 = vrot.slane %v312, %v320
    %v322 = vlaneseq
    %v323 = vshrl.u32 %v322, 7
    %v324 = vsub.s32 2, %v323
    %v325 = vrot.slane %v312, %v324
    %v326 = vlaneseq
    %v327 = vshrl.u32 %v326, 7
    %v328 = vsub.s32 3, %v327
    %v329 = vrot.slane %v312, %v328
    %v530 = vunpack.c.l.b16 %v116
    %v531 = vunpack.c.h.b16 %v116
    %v532 = vunpack.c.l.b16 %v117
    %v533 = vunpack.c.h.b16 %v117
    %v534 = vunpack.c.l.b16 %v118
    %v535 = vunpack.c.h.b16 %v118
    %v536 = vunpack.c.l.b16 %v119
    %v537 = vunpack.c.h.b16 %v119
    %v538 = vunpack.c.l.b16 %v120
    %v539 = vunpack.c.h.b16 %v120
    %v540 = vunpack.c.l.b16 %v121
    %v541 = vunpack.c.h.b16 %v121
    %v542 = vunpack.c.l.b16 %v122
    %v543 = vunpack.c.h.b16 %v122
    %v544 = vunpack.c.l.b16 %v123
    %v545 = vunpack.c.h.b16 %v123
    %v546 = vunpack.c.l.b16 %v124
    %v547 = vunpack.c.h.b16 %v124
    %v548 = vunpack.c.l.b16 %v125
    %v549 = vunpack.c.h.b16 %v125
    %v550 = vunpack.c.l.b16 %v126
    %v551 = vunpack.c.h.b16 %v126
    %v552 = vunpack.c.l.b16 %v127
    %v553 = vunpack.c.h.b16 %v127
    %v554 = vunpack.c.l.b16 %v128
    %v555 = vunpack.c.h.b16 %v128
    %v556 = vunpack.c.l.b16 %v129
    %v557 = vunpack.c.h.b16 %v129
    %v558 = vunpack.c.l.b16 %v130
    %v559 = vunpack.c.h.b16 %v130
    %v560 = vunpack.c.l.b16 %v131
    %v561 = vunpack.c.h.b16 %v131
    %v562 = vunpack.c.l.b16 %v132
    %v563 = vunpack.c.h.b16 %v132
    %v564 = vunpack.c.l.b16 %v133
    %v565 = vunpack.c.h.b16 %v133
    %v566 = vunpack.c.l.b16 %v134
    %v567 = vunpack.c.h.b16 %v134
    %v568 = vunpack.c.l.b16 %v135
    %v569 = vunpack.c.h.b16 %v135
    %v570 = vunpack.c.l.b16 %v136
    %v571 = vunpack.c.h.b16 %v136
    %v572 = vunpack.c.l.b16 %v137
    %v573 = vunpack.c.h.b16 %v137
    %v574 = vunpack.c.l.b16 %v138
    %v575 = vunpack.c.h.b16 %v138
    %v576 = vunpack.c.l.b16 %v139
    %v577 = vunpack.c.h.b16 %v139
    %v578 = vunpack.c.l.b16 %v140
    %v579 = vunpack.c.h.b16 %v140
    %v580 = vunpack.c.l.b16 %v141
    %v581 = vunpack.c.h.b16 %v141
    %v582 = vunpack.c.l.b16 %v142
    %v583 = vunpack.c.h.b16 %v142
    %v584 = vunpack.c.l.b16 %v143
    %v585 = vunpack.c.h.b16 %v143
    %v586 = vunpack.c.l.b16 %v144
    %v587 = vunpack.c.h.b16 %v144
    %v588 = vunpack.c.l.b16 %v145
    %v589 = vunpack.c.h.b16 %v145
    %v590 = vunpack.c.l.b16 %v146
    %v591 = vunpack.c.h.b16 %v146
    %v592 = vunpack.c.l.b16 %v147
    %v593 = vunpack.c.h.b16 %v147
    %v594 = vunpack.c.l.b16 %v148
    %v595 = vunpack.c.h.b16 %v148
    %v596 = vunpack.c.l.b16 %v149
    %v597 = vunpack.c.h.b16 %v149
    %v598 = vunpack.c.l.b16 %v150
    %v599 = vunpack.c.h.b16 %v150
    %v600 = vunpack.c.l.b16 %v151
    %v601 = vunpack.c.h.b16 %v151
    %v602 = vunpack.c.l.b16 %v152
    %v603 = vunpack.c.h.b16 %v152
    %v604 = vunpack.c.l.b16 %v153
    %v605 = vunpack.c.h.b16 %v153
    %v606 = vunpack.c.l.b16 %v154
    %v607 = vunpack.c.h.b16 %v154
    %v608 = vunpack.c.l.b16 %v155
    %v609 = vunpack.c.h.b16 %v155
    %v610 = vunpack.c.l.b16 %v156
    %v611 = vunpack.c.h.b16 %v156
    %v612 = vunpack.c.l.b16 %v157
    %v613 = vunpack.c.h.b16 %v157
    %v614 = vunpack.c.l.b16 %v158
    %v615 = vunpack.c.h.b16 %v158
    %v616 = vunpack.c.l.b16 %v159
    %v617 = vunpack.c.h.b16 %v159
    %v618 = vunpack.c.l.b16 %v160
    %v619 = vunpack.c.h.b16 %v160
    %v620 = vunpack.c.l.b16 %v161
    %v621 = vunpack.c.h.b16 %v161
    %v622 = vunpack.c.l.b16 %v162
    %v623 = vunpack.c.h.b16 %v162
    %v624 = vunpack.c.l.b16 %v163
    %v625 = vunpack.c.h.b16 %v163
    %v626 = vunpack.c.l.b16 %v164
    %v627 = vunpack.c.h.b16 %v164
    %v628 = vunpack.c.l.b16 %v165
    %v629 = vunpack.c.h.b16 %v165
    %v630 = vunpack.c.l.b16 %v166
    %v631 = vunpack.c.h.b16 %v166
    %v632 = vunpack.c.l.b16 %v167
    %v633 = vunpack.c.h.b16 %v167
    %v634 = vunpack.c.l.b16 %v168
    %v635 = vunpack.c.h.b16 %v168
    %v636 = vunpack.c.l.b16 %v169
    %v637 = vunpack.c.h.b16 %v169
    %v638 = vunpack.c.l.b16 %v170
    %v639 = vunpack.c.h.b16 %v170
    %v640 = vunpack.c.l.b16 %v171
    %v641 = vunpack.c.h.b16 %v171
    %v642 = vunpack.c.l.b16 %v172
    %v643 = vunpack.c.h.b16 %v172
    %v644 = vunpack.c.l.b16 %v173
    %v645 = vunpack.c.h.b16 %v173
    %v646 = vunpack.c.l.b16 %v174
    %v647 = vunpack.c.h.b16 %v174
    %v648 = vunpack.c.l.b16 %v175
    %v649 = vunpack.c.h.b16 %v175
    %v650 = vunpack.c.l.b16 %v176
    %v651 = vunpack.c.h.b16 %v176
    %v652 = vunpack.c.l.b16 %v177
    %v653 = vunpack.c.h.b16 %v177
    %v654 = vunpack.c.l.b16 %v178
    %v655 = vunpack.c.h.b16 %v178
    %v656 = vunpack.c.l.b16 %v179
    %v657 = vunpack.c.h.b16 %v179
    %v658 = vunpack.c.l.b16 %v180
    %v659 = vunpack.c.h.b16 %v180
    %v660 = vunpack.c.l.b16 %v181
    %v661 = vunpack.c.h.b16 %v181
    %v662 = vunpack.c.l.b16 %v182
    %v663 = vunpack.c.h.b16 %v182
    %v664 = vunpack.c.l.b16 %v183
    %v665 = vunpack.c.h.b16 %v183
    %v666 = vunpack.c.l.b16 %v184
    %v667 = vunpack.c.h.b16 %v184
    %v668 = vunpack.c.l.b16 %v185
    %v669 = vunpack.c.h.b16 %v185
    %v670 = vunpack.c.l.b16 %v186
    %v671 = vunpack.c.h.b16 %v186
    %v672 = vunpack.c.l.b16 %v187
    %v673 = vunpack.c.h.b16 %v187
    %v674 = vunpack.c.l.b16 %v188
    %v675 = vunpack.c.h.b16 %v188
    %v676 = vunpack.c.l.b16 %v189
    %v677 = vunpack.c.h.b16 %v189
    %v678 = vunpack.c.l.b16 %v190
    %v679 = vunpack.c.h.b16 %v190
    %v680 = vunpack.c.l.b16 %v191
    %v681 = vunpack.c.h.b16 %v191
    %v682 = vunpack.c.l.b16 %v192
    %v683 = vunpack.c.h.b16 %v192
    %v684 = vunpack.c.l.b16 %v193
    %v685 = vunpack.c.h.b16 %v193
    %v686 = vunpack.c.l.b16 %v194
    %v687 = vunpack.c.h.b16 %v194
    %v688 = vunpack.c.l.b16 %v195
    %v689 = vunpack.c.h.b16 %v195
    %v690 = vunpack.c.l.b16 %v196
    %v691 = vunpack.c.h.b16 %v196
    %v692 = vunpack.c.l.b16 %v197
    %v693 = vunpack.c.h.b16 %v197
    %v694 = vunpack.c.l.b16 %v198
    %v695 = vunpack.c.h.b16 %v198
    %v696 = vunpack.c.l.b16 %v199
    %v697 = vunpack.c.h.b16 %v199
    %v698 = vunpack.c.l.b16 %v200
    %v699 = vunpack.c.h.b16 %v200
    %v700 = vunpack.c.l.b16 %v201
    %v701 = vunpack.c.h.b16 %v201
    %v702 = vunpack.c.l.b16 %v202
    %v703 = vunpack.c.h.b16 %v202
    %v704 = vunpack.c.l.b16 %v203
    %v705 = vunpack.c.h.b16 %v203
    %v706 = vunpack.c.l.b16 %v204
    %v707 = vunpack.c.h.b16 %v204
    %v708 = vunpack.c.l.b16 %v205
    %v709 = vunpack.c.h.b16 %v205
    %v710 = vunpack.c.l.b16 %v206
    %v711 = vunpack.c.h.b16 %v206
    %v712 = vunpack.c.l.b16 %v207
    %v713 = vunpack.c.h.b16 %v207
    %v714 = vunpack.c.l.b16 %v208
    %v715 = vunpack.c.h.b16 %v208
    %v716 = vunpack.c.l.b16 %v209
    %v717 = vunpack.c.h.b16 %v209
    %v718 = vunpack.c.l.b16 %v210
    %v719 = vunpack.c.h.b16 %v210
    %v720 = vunpack.c.l.b16 %v211
    %v721 = vunpack.c.h.b16 %v211
    %v722 = vunpack.c.l.b16 %v212
    %v723 = vunpack.c.h.b16 %v212
    %v724 = vunpack.c.l.b16 %v213
    %v725 = vunpack.c.h.b16 %v213
    %v726 = vunpack.c.l.b16 %v214
    %v727 = vunpack.c.h.b16 %v214
    %v728 = vunpack.c.l.b16 %v215
    %v729 = vunpack.c.h.b16 %v215
    %v730 = vunpack.c.l.b16 %v216
    %v731 = vunpack.c.h.b16 %v216
    %v732 = vunpack.c.l.b16 %v217
    %v733 = vunpack.c.h.b16 %v217
    %v734 = vunpack.c.l.b16 %v218
    %v735 = vunpack.c.h.b16 %v218
    %v736 = vunpack.c.l.b16 %v219
    %v737 = vunpack.c.h.b16 %v219
    %v738 = vunpack.c.l.b16 %v220
    %v739 = vunpack.c.h.b16 %v220
    %v740 = vunpack.c.l.b16 %v221
    %v741 = vunpack.c.h.b16 %v221
    %v742 = vunpack.c.l.b16 %v222
    %v743 = vunpack.c.h.b16 %v222
    %v744 = vunpack.c.l.b16 %v223
    %v745 = vunpack.c.h.b16 %v223
    %v746 = vunpack.c.l.b16 %v224
    %v747 = vunpack.c.h.b16 %v224
    %v748 = vunpack.c.l.b16 %v225
    %v749 = vunpack.c.h.b16 %v225
    %v750 = vunpack.c.l.b16 %v226
    %v751 = vunpack.c.h.b16 %v226
    %v752 = vunpack.c.l.b16 %v227
    %v753 = vunpack.c.h.b16 %v227
    %v754 = vunpack.c.l.b16 %v228
    %v755 = vunpack.c.h.b16 %v228
    %v756 = vunpack.c.l.b16 %v229
    %v757 = vunpack.c.h.b16 %v229
    %v758 = vunpack.c.l.b16 %v230
    %v759 = vunpack.c.h.b16 %v230
    %v760 = vunpack.c.l.b16 %v231
    %v761 = vunpack.c.h.b16 %v231
    %v762 = vunpack.c.l.b16 %v232
    %v763 = vunpack.c.h.b16 %v232
    %v764 = vunpack.c.l.b16 %v233
    %v765 = vunpack.c.h.b16 %v233
    %v766 = vunpack.c.l.b16 %v234
    %v767 = vunpack.c.h.b16 %v234
    %v768 = vunpack.c.l.b16 %v235
    %v769 = vunpack.c.h.b16 %v235
    %v770 = vunpack.c.l.b16 %v236
    %v771 = vunpack.c.h.b16 %v236
    %v772 = vunpack.c.l.b16 %v237
    %v773 = vunpack.c.h.b16 %v237
    %v774 = vunpack.c.l.b16 %v238
    %v775 = vunpack.c.h.b16 %v238
    %v776 = vunpack.c.l.b16 %v239
    %v777 = vunpack.c.h.b16 %v239
    %v778 = vunpack.c.l.b16 %v240
    %v779 = vunpack.c.h.b16 %v240
    %v780 = vunpack.c.l.b16 %v241
    %v781 = vunpack.c.h.b16 %v241
    %v782 = vunpack.c.l.b16 %v242
    %v783 = vunpack.c.h.b16 %v242
    %v784 = vunpack.c.l.b16 %v243
    %v785 = vunpack.c.h.b16 %v243
    %v786 = vunpack.c.l.b16 %v244
    %v787 = vunpack.c.h.b16 %v244
    %v788 = vunpack.c.l.b16 %v245
    %v789 = vunpack.c.h.b16 %v245
    %v790 = vunpack.c.l.b16 %v246
    %v791 = vunpack.c.h.b16 %v246
    %v792 = vunpack.c.l.b16 %v247
    %v793 = vunpack.c.h.b16 %v247
    %v794 = vunpack.c.l.b16 %v248
    %v795 = vunpack.c.h.b16 %v248
    %v796 = vunpack.c.l.b16 %v249
    %v797 = vunpack.c.h.b16 %v249
    %v798 = vunpack.c.l.b16 %v250
    %v799 = vunpack.c.h.b16 %v250
    %v800 = vunpack.c.l.b16 %v251
    %v801 = vunpack.c.h.b16 %v251
    %v802 = vunpack.c.l.b16 %v252
    %v803 = vunpack.c.h.b16 %v252
    %v804 = vunpack.c.l.b16 %v253
    %v805 = vunpack.c.h.b16 %v253
    %v806 = vunpack.c.l.b16 %v254
    %v807 = vunpack.c.h.b16 %v254
    %v808 = vunpack.c.l.b16 %v255
    %v809 = vunpack.c.h.b16 %v255
    %v810 = vunpack.c.l.b16 %v256
    %v811 = vunpack.c.h.b16 %v256
    %v812 = vunpack.c.l.b16 %v257
    %v813 = vunpack.c.h.b16 %v257
    %v814 = vunpack.c.l.b16 %v258
    %v815 = vunpack.c.h.b16 %v258
    %v816 = vunpack.c.l.b16 %v259
    %v817 = vunpack.c.h.b16 %v259
    %v818 = vunpack.c.l.b16 %v260
    %v819 = vunpack.c.h.b16 %v260
    %v820 = vunpack.c.l.b16 %v261
    %v821 = vunpack.c.h.b16 %v261
    %v822 = vunpack.c.l.b16 %v262
    %v823 = vunpack.c.h.b16 %v262
    %v824 = vunpack.c.l.b16 %v263
    %v825 = vunpack.c.h.b16 %v263
    %v826 = vunpack.c.l.b16 %v264
    %v827 = vunpack.c.h.b16 %v264
    %v828 = vunpack.c.l.b16 %v265
    %v829 = vunpack.c.h.b16 %v265
    %v830 = vunpack.c.l.b16 %v266
    %v831 = vunpack.c.h.b16 %v266
    %v832 = vunpack.c.l.b16 %v267
    %v833 = vunpack.c.h.b16 %v267
    %v834 = vunpack.c.l.b16 %v268
    %v835 = vunpack.c.h.b16 %v268
    %v836 = vunpack.c.l.b16 %v269
    %v837 = vunpack.c.h.b16 %v269
    %v838 = vunpack.c.l.b16 %v270
    %v839 = vunpack.c.h.b16 %v270
    %v840 = vunpack.c.l.b16 %v271
    %v841 = vunpack.c.h.b16 %v271
    %v842 = vunpack.c.l.b16 %v272
    %v843 = vunpack.c.h.b16 %v272
    %v844 = vunpack.c.l.b16 %v273
    %v845 = vunpack.c.h.b16 %v273
    %v846 = vunpack.c.l.b16 %v274
    %v847 = vunpack.c.h.b16 %v274
    %v848 = vunpack.c.l.b16 %v275
    %v849 = vunpack.c.h.b16 %v275
    %v850 = vunpack.c.l.b16 %v276
    %v851 = vunpack.c.h.b16 %v276
    %v852 = vunpack.c.l.b16 %v277
    %v853 = vunpack.c.h.b16 %v277
    %v854 = vunpack.c.l.b16 %v278
    %v855 = vunpack.c.h.b16 %v278
    %v856 = vunpack.c.l.b16 %v279
    %v857 = vunpack.c.h.b16 %v279
    %v858 = vunpack.c.l.b16 %v280
    %v859 = vunpack.c.h.b16 %v280
    %v860 = vunpack.c.l.b16 %v281
    %v861 = vunpack.c.h.b16 %v281
    %v862 = vunpack.c.l.b16 %v282
    %v863 = vunpack.c.h.b16 %v282
    %v864 = vunpack.c.l.b16 %v283
    %v865 = vunpack.c.h.b16 %v283
    %v866 = vunpack.c.l.b16 %v284
    %v867 = vunpack.c.h.b16 %v284
    %v868 = vunpack.c.l.b16 %v285
    %v869 = vunpack.c.h.b16 %v285
    %v870 = vunpack.c.l.b16 %v286
    %v871 = vunpack.c.h.b16 %v286
    %v872 = vunpack.c.l.b16 %v287
    %v873 = vunpack.c.h.b16 %v287
    %v874 = vunpack.c.l.b16 %v288
    %v875 = vunpack.c.h.b16 %v288
    %v876 = vunpack.c.l.b16 %v289
    %v877 = vunpack.c.h.b16 %v289
    %v878 = vunpack.c.l.b16 %v290
    %v879 = vunpack.c.h.b16 %v290
    %v880 = vunpack.c.l.b16 %v291
    %v881 = vunpack.c.h.b16 %v291
    %v882 = vunpack.c.l.b16 %v292
    %v883 = vunpack.c.h.b16 %v292
    %v884 = vunpack.c.l.b16 %v293
    %v885 = vunpack.c.h.b16 %v293
    %v886 = vunpack.c.l.b16 %v294
    %v887 = vunpack.c.h.b16 %v294
    %v888 = vunpack.c.l.b16 %v295
    %v889 = vunpack.c.h.b16 %v295
    %v890 = vunpack.c.l.b16 %v296
    %v891 = vunpack.c.h.b16 %v296
    %v892 = vunpack.c.l.b16 %v297
    %v893 = vunpack.c.h.b16 %v297
    %v894 = vunpack.c.l.b16 %v298
    %v895 = vunpack.c.h.b16 %v298
    %v896 = vunpack.c.l.b16 %v299
    %v897 = vunpack.c.h.b16 %v299
    %v898 = vunpack.c.l.b16 %v300
    %v899 = vunpack.c.h.b16 %v300
    %v900 = vunpack.c.l.b16 %v301
    %v901 = vunpack.c.h.b16 %v301
    %v902 = vunpack.c.l.b16 %v302
    %v903 = vunpack.c.h.b16 %v302
    %v904 = vunpack.c.l.b16 %v303
    %v905 = vunpack.c.h.b16 %v303
    %v906 = vunpack.c.l.b16 %v304
    %v907 = vunpack.c.h.b16 %v304
    %v908 = vunpack.c.l.b16 %v305
    %v909 = vunpack.c.h.b16 %v305
    %v910 = vunpack.c.l.b16 %v306
    %v911 = vunpack.c.h.b16 %v306
    %v912 = vunpack.c.l.b16 %v307
    %v913 = vunpack.c.h.b16 %v307
    %v914 = vunpack.c.l.b16 %v308
    %v915 = vunpack.c.h.b16 %v308
    %v916 = vunpack.c.l.b16 %v309
    %v917 = vunpack.c.h.b16 %v309
    %v918 = vunpack.c.l.b16 %v310
    %v919 = vunpack.c.h.b16 %v310
    %v920 = vunpack.c.l.b16 %v311
    %v921 = vunpack.c.h.b16 %v311
    %v922 = vpack.c.b16 %v534, %v530
    %v923 = vpack.c.b16 %v535, %v531
    %v924 = vpack.c.b16 %v536, %v532
    %v925 = vpack.c.b16 %v537, %v533
    %v926 = vpack.c.b16 %v542, %v538
    %v927 = vpack.c.b16 %v543, %v539
    %v928 = vpack.c.b16 %v544, %v540
    %v929 = vpack.c.b16 %v545, %v541
    %v930 = vpack.c.b16 %v550, %v546
    %v931 = vpack.c.b16 %v551, %v547
    %v932 = vpack.c.b16 %v552, %v548
    %v933 = vpack.c.b16 %v553, %v549
    %v934 = vpack.c.b16 %v558, %v554
    %v935 = vpack.c.b16 %v559, %v555
    %v936 = vpack.c.b16 %v560, %v556
    %v937 = vpack.c.b16 %v561, %v557
    %v938 = vpack.c.b16 %v566, %v562
    %v939 = vpack.c.b16 %v567, %v563
    %v940 = vpack.c.b16 %v568, %v564
    %v941 = vpack.c.b16 %v569, %v565
    %v942 = vpack.c.b16 %v574, %v570
    %v943 = vpack.c.b16 %v575, %v571
    %v944 = vpack.c.b16 %v576, %v572
    %v945 = vpack.c.b16 %v577, %v573
    %v946 = vpack.c.b16 %v582, %v578
    %v947 = vpack.c.b16 %v583, %v579
    %v948 = vpack.c.b16 %v584, %v580
    %v949 = vpack.c.b16 %v585, %v581
    %v950 = vpack.c.b16 %v590, %v586
    %v951 = vpack.c.b16 %v591, %v587
    %v952 = vpack.c.b16 %v592, %v588
    %v953 = vpack.c.b16 %v593, %v589
    %v954 = vpack.c.b16 %v598, %v594
    %v955 = vpack.c.b16 %v599, %v595
    %v956 = vpack.c.b16 %v600, %v596
    %v957 = vpack.c.b16 %v601, %v597
    %v958 = vpack.c.b16 %v606, %v602
    %v959 = vpack.c.b16 %v607, %v603
    %v960 = vpack.c.b16 %v608, %v604
    %v961 = vpack.c.b16 %v609, %v605
    %v962 = vpack.c.b16 %v614, %v610
    %v963 = vpack.c.b16 %v615, %v611
    %v964 = vpack.c.b16 %v616, %v612
    %v965 = vpack.c.b16 %v617, %v613
    %v966 = vpack.c.b16 %v622, %v618
    %v967 = vpack.c.b16 %v623, %v619
    %v968 = vpack.c.b16 %v624, %v620
    %v969 = vpack.c.b16 %v625, %v621
    %v970 = vpack.c.b16 %v630, %v626
    %v971 = vpack.c.b16 %v631, %v627
    %v972 = vpack.c.b16 %v632, %v628
    %v973 = vpack.c.b16 %v633, %v629
    %v974 = vpack.c.b16 %v638, %v634
    %v975 = vpack.c.b16 %v639, %v635
    %v976 = vpack.c.b16 %v640, %v636
    %v977 = vpack.c.b16 %v641, %v637
    %v978 = vpack.c.b16 %v646, %v642
    %v979 = vpack.c.b16 %v647, %v643
    %v980 = vpack.c.b16 %v648, %v644
    %v981 = vpack.c.b16 %v649, %v645
    %v982 = vpack.c.b16 %v654, %v650
    %v983 = vpack.c.b16 %v655, %v651
    %v984 = vpack.c.b16 %v656, %v652
    %v985 = vpack.c.b16 %v657, %v653
    %v986 = vpack.c.b16 %v662, %v658
    %v987 = vpack.c.b16 %v663, %v659
    %v988 = vpack.c.b16 %v664, %v660
    %v989 = vpack.c.b16 %v665, %v661
    %v990 = vpack.c.b16 %v670, %v666
    %v991 = vpack.c.b16 %v671, %v667
    %v992 = vpack.c.b16 %v672, %v668
    %v993 = vpack.c.b16 %v673, %v669
    %v994 = vpack.c.b16 %v678, %v674
    %v995 = vpack.c.b16 %v679, %v675
    %v996 = vpack.c.b16 %v680, %v676
    %v997 = vpack.c.b16 %v681, %v677
    %v998 = vpack.c.b16 %v686, %v682
    %v999 = vpack.c.b16 %v687, %v683
    %v1000 = vpack.c.b16 %v688, %v684
    %v1001 = vpack.c.b16 %v689, %v685
    %v1002 = vpack.c.b16 %v694, %v690
    %v1003 = vpack.c.b16 %v695, %v691
    %v1004 = vpack.c.b16 %v696, %v692
    %v1005 = vpack.c.b16 %v697, %v693
    %v1006 = vpack.c.b16 %v702, %v698
    %v1007 = vpack.c.b16 %v703, %v699
    %v1008 = vpack.c.b16 %v704, %v700
    %v1009 = vpack.c.b16 %v705, %v701
    %v1010 = vpack.c.b16 %v710, %v706
    %v1011 = vpack.c.b16 %v711, %v707
    %v1012 = vpack.c.b16 %v712, %v708
    %v1013 = vpack.c.b16 %v713, %v709
    %v1014 = vpack.c.b16 %v718, %v714
    %v1015 = vpack.c.b16 %v719, %v715
    %v1016 = vpack.c.b16 %v720, %v716
    %v1017 = vpack.c.b16 %v721, %v717
    %v1018 = vpack.c.b16 %v726, %v722
    %v1019 = vpack.c.b16 %v727, %v723
    %v1020 = vpack.c.b16 %v728, %v724
    %v1021 = vpack.c.b16 %v729, %v725
    %v1022 = vpack.c.b16 %v734, %v730
    %v1023 = vpack.c.b16 %v735, %v731
    %v1024 = vpack.c.b16 %v736, %v732
    %v1025 = vpack.c.b16 %v737, %v733
    %v1026 = vpack.c.b16 %v742, %v738
    %v1027 = vpack.c.b16 %v743, %v739
    %v1028 = vpack.c.b16 %v744, %v740
    %v1029 = vpack.c.b16 %v745, %v741
    %v1030 = vpack.c.b16 %v750, %v746
    %v1031 = vpack.c.b16 %v751, %v747
    %v1032 = vpack.c.b16 %v752, %v748
    %v1033 = vpack.c.b16 %v753, %v749
    %v1034 = vpack.c.b16 %v758, %v754
    %v1035 = vpack.c.b16 %v759, %v755
    %v1036 = vpack.c.b16 %v760, %v756
    %v1037 = vpack.c.b16 %v761, %v757
    %v1038 = vpack.c.b16 %v766, %v762
    %v1039 = vpack.c.b16 %v767, %v763
    %v1040 = vpack.c.b16 %v768, %v764
    %v1041 = vpack.c.b16 %v769, %v765
    %v1042 = vpack.c.b16 %v774, %v770
    %v1043 = vpack.c.b16 %v775, %v771
    %v1044 = vpack.c.b16 %v776, %v772
    %v1045 = vpack.c.b16 %v777, %v773
    %v1046 = vpack.c.b16 %v782, %v778
    %v1047 = vpack.c.b16 %v783, %v779
    %v1048 = vpack.c.b16 %v784, %v780
    %v1049 = vpack.c.b16 %v785, %v781
    %v1050 = vpack.c.b16 %v790, %v786
    %v1051 = vpack.c.b16 %v791, %v787
    %v1052 = vpack.c.b16 %v792, %v788
    %v1053 = vpack.c.b16 %v793, %v789
    %v1054 = vpack.c.b16 %v798, %v794
    %v1055 = vpack.c.b16 %v799, %v795
    %v1056 = vpack.c.b16 %v800, %v796
    %v1057 = vpack.c.b16 %v801, %v797
    %v1058 = vpack.c.b16 %v806, %v802
    %v1059 = vpack.c.b16 %v807, %v803
    %v1060 = vpack.c.b16 %v808, %v804
    %v1061 = vpack.c.b16 %v809, %v805
    %v1062 = vpack.c.b16 %v814, %v810
    %v1063 = vpack.c.b16 %v815, %v811
    %v1064 = vpack.c.b16 %v816, %v812
    %v1065 = vpack.c.b16 %v817, %v813
    %v1066 = vpack.c.b16 %v822, %v818
    %v1067 = vpack.c.b16 %v823, %v819
    %v1068 = vpack.c.b16 %v824, %v820
    %v1069 = vpack.c.b16 %v825, %v821
    %v1070 = vpack.c.b16 %v830, %v826
    %v1071 = vpack.c.b16 %v831, %v827
    %v1072 = vpack.c.b16 %v832, %v828
    %v1073 = vpack.c.b16 %v833, %v829
    %v1074 = vpack.c.b16 %v838, %v834
    %v1075 = vpack.c.b16 %v839, %v835
    %v1076 = vpack.c.b16 %v840, %v836
    %v1077 = vpack.c.b16 %v841, %v837
    %v1078 = vpack.c.b16 %v846, %v842
    %v1079 = vpack.c.b16 %v847, %v843
    %v1080 = vpack.c.b16 %v848, %v844
    %v1081 = vpack.c.b16 %v849, %v845
    %v1082 = vpack.c.b16 %v854, %v850
    %v1083 = vpack.c.b16 %v855, %v851
    %v1084 = vpack.c.b16 %v856, %v852
    %v1085 = vpack.c.b16 %v857, %v853
    %v1086 = vpack.c.b16 %v862, %v858
    %v1087 = vpack.c.b16 %v863, %v859
    %v1088 = vpack.c.b16 %v864, %v860
    %v1089 = vpack.c.b16 %v865, %v861
    %v1090 = vpack.c.b16 %v870, %v866
    %v1091 = vpack.c.b16 %v871, %v867
    %v1092 = vpack.c.b16 %v872, %v868
    %v1093 = vpack.c.b16 %v873, %v869
    %v1094 = vpack.c.b16 %v878, %v874
    %v1095 = vpack.c.b16 %v879, %v875
    %v1096 = vpack.c.b16 %v880, %v876
    %v1097 = vpack.c.b16 %v881, %v877
    %v1098 = vpack.c.b16 %v886, %v882
    %v1099 = vpack.c.b16 %v887, %v883
    %v1100 = vpack.c.b16 %v888, %v884
    %v1101 = vpack.c.b16 %v889, %v885
    %v1102 = vpack.c.b16 %v894, %v890
    %v1103 = vpack.c.b16 %v895, %v891
    %v1104 = vpack.c.b16 %v896, %v892
    %v1105 = vpack.c.b16 %v897, %v893
    %v1106 = vpack.c.b16 %v902, %v898
    %v1107 = vpack.c.b16 %v903, %v899
    %v1108 = vpack.c.b16 %v904, %v900
    %v1109 = vpack.c.b16 %v905, %v901
    %v1110 = vpack.c.b16 %v910, %v906
    %v1111 = vpack.c.b16 %v911, %v907
    %v1112 = vpack.c.b16 %v912, %v908
    %v1113 = vpack.c.b16 %v913, %v909
    %v1114 = vpack.c.b16 %v918, %v914
    %v1115 = vpack.c.b16 %v919, %v915
    %v1116 = vpack.c.b16 %v920, %v916
    %v1117 = vpack.c.b16 %v921, %v917
    %vm1314 = vcmask 130048
    %v1316 = vsel %vm1314, %v108, 0
    %v1319 = vsel %vm1314, %v115, 0
    %1321 = vmatprep.subr.bf16.mxu0 %v951
    %1322 = vmatpush1.bf16.msra.mxu0 %v950
    %1323 = vmatprep.subr.bf16.mxu0 %v947
    %1324 = vmatpush1.bf16.msra.mxu0 %v946
    %1325 = vmatprep.subr.bf16.mxu0 %v943
    %1326 = vmatpush1.bf16.msra.mxu0 %v942
    %1327 = vmatprep.subr.bf16.mxu0 %v939
    %1328 = vmatpush1.bf16.msra.mxu0 %v938
    %1329 = vmatprep.subr.bf16.mxu0 %v935
    %1330 = vmatpush1.bf16.msra.mxu0 %v934
    %1331 = vmatprep.subr.bf16.mxu0 %v931
    %1332 = vmatpush1.bf16.msra.mxu0 %v930
    %1333 = vmatprep.subr.bf16.mxu0 %v927
    %1334 = vmatpush1.bf16.msra.mxu0 %v926
    %1335 = vmatprep.subr.bf16.mxu0 %v923
    %1336 = vmatpush1.bf16.msra.mxu0 %v922
    %1337 = vmatprep.subr.bf16.mxu0 %v983
    %1338 = vmatpush2.bf16.msra.mxu0 %v982
    %1339 = vmatprep.subr.bf16.mxu0 %v979
    %1340 = vmatpush2.bf16.msra.mxu0 %v978
    %1341 = vmatprep.subr.bf16.mxu0 %v975
    %1342 = vmatpush2.bf16.msra.mxu0 %v974
    %1343 = vmatprep.subr.bf16.mxu0 %v971
    %1344 = vmatpush2.bf16.msra.mxu0 %v970
    %1345 = vmatprep.subr.bf16.mxu0 %v967
    %1346 = vmatpush2.bf16.msra.mxu0 %v966
    %1347 = vmatprep.subr.bf16.mxu0 %v963
    %1348 = vmatpush2.bf16.msra.mxu0 %v962
    %1349 = vmatprep.subr.bf16.mxu0 %v959
    %1350 = vmatpush2.bf16.msra.mxu0 %v958
    %1351 = vmatprep.subr.bf16.mxu0 %v955
    %1352 = vmatpush2.bf16.msra.mxu0 %v954
    %1353 = vmatprep.mubr.bf16.mxu0 %v103
    %1354 = vmatmul.mubr.bf16.gmra.mxu0 %v102
    %v1355 = vpop.f32.mrf.mxu0
    %v1356 = vadd.f32 %v317, %v1355
    %v1357 = vpop.f32.mrf.mxu0
    %v1358 = vadd.f32 %v321, %v1357
    %v1359 = vpop.f32.mrf.mxu0
    %v1360 = vadd.f32 %v317, %v1359
    %v1361 = vpop.f32.mrf.mxu0
    %v1362 = vadd.f32 %v321, %v1361
    %1363 = vmatprep.mubr.bf16.mxu0 %v110
    %1364 = vmatmul.mubr.bf16.gmra.mxu0 %v109
    %v1365 = vpop.f32.mrf.mxu0
    %v1366 = vadd.f32 %v317, %v1365
    %v1367 = vpop.f32.mrf.mxu0
    %v1368 = vadd.f32 %v321, %v1367
    %v1369 = vpop.f32.mrf.mxu0
    %v1370 = vadd.f32 %v317, %v1369
    %v1371 = vpop.f32.mrf.mxu0
    %v1372 = vadd.f32 %v321, %v1371
    %1373 = vdwg.mxu0
    %1374 = vmatprep.subr.bf16.mxu0 %v1015
    %1375 = vmatpush1.bf16.msra.mxu0 %v1014
    %1376 = vmatprep.subr.bf16.mxu0 %v1011
    %1377 = vmatpush1.bf16.msra.mxu0 %v1010
    %1378 = vmatprep.subr.bf16.mxu0 %v1007
    %1379 = vmatpush1.bf16.msra.mxu0 %v1006
    %1380 = vmatprep.subr.bf16.mxu0 %v1003
    %1381 = vmatpush1.bf16.msra.mxu0 %v1002
    %1382 = vmatprep.subr.bf16.mxu0 %v999
    %1383 = vmatpush1.bf16.msra.mxu0 %v998
    %1384 = vmatprep.subr.bf16.mxu0 %v995
    %1385 = vmatpush1.bf16.msra.mxu0 %v994
    %1386 = vmatprep.subr.bf16.mxu0 %v991
    %1387 = vmatpush1.bf16.msra.mxu0 %v990
    %1388 = vmatprep.subr.bf16.mxu0 %v987
    %1389 = vmatpush1.bf16.msra.mxu0 %v986
    %1390 = vmatprep.subr.bf16.mxu0 %v1047
    %1391 = vmatpush2.bf16.msra.mxu0 %v1046
    %1392 = vmatprep.subr.bf16.mxu0 %v1043
    %1393 = vmatpush2.bf16.msra.mxu0 %v1042
    %1394 = vmatprep.subr.bf16.mxu0 %v1039
    %1395 = vmatpush2.bf16.msra.mxu0 %v1038
    %1396 = vmatprep.subr.bf16.mxu0 %v1035
    %1397 = vmatpush2.bf16.msra.mxu0 %v1034
    %1398 = vmatprep.subr.bf16.mxu0 %v1031
    %1399 = vmatpush2.bf16.msra.mxu0 %v1030
    %1400 = vmatprep.subr.bf16.mxu0 %v1027
    %1401 = vmatpush2.bf16.msra.mxu0 %v1026
    %1402 = vmatprep.subr.bf16.mxu0 %v1023
    %1403 = vmatpush2.bf16.msra.mxu0 %v1022
    %1404 = vmatprep.subr.bf16.mxu0 %v1019
    %1405 = vmatpush2.bf16.msra.mxu0 %v1018
    %1406 = vmatprep.mubr.bf16.mxu0 %v105
    %1407 = vmatmul.mubr.bf16.gmra.mxu0 %v104
    %v1408 = vpop.f32.mrf.mxu0
    %v1409 = vadd.f32 %v1356, %v1408
    %v1410 = vpop.f32.mrf.mxu0
    %v1411 = vadd.f32 %v1358, %v1410
    %v1412 = vpop.f32.mrf.mxu0
    %v1413 = vadd.f32 %v1360, %v1412
    %v1414 = vpop.f32.mrf.mxu0
    %v1415 = vadd.f32 %v1362, %v1414
    %1416 = vmatprep.mubr.bf16.mxu0 %v112
    %1417 = vmatmul.mubr.bf16.gmra.mxu0 %v111
    %v1418 = vpop.f32.mrf.mxu0
    %v1419 = vadd.f32 %v1366, %v1418
    %v1420 = vpop.f32.mrf.mxu0
    %v1421 = vadd.f32 %v1368, %v1420
    %v1422 = vpop.f32.mrf.mxu0
    %v1423 = vadd.f32 %v1370, %v1422
    %v1424 = vpop.f32.mrf.mxu0
    %v1425 = vadd.f32 %v1372, %v1424
    %1426 = vdwg.mxu0
    %1427 = vmatprep.subr.bf16.mxu0 %v1079
    %1428 = vmatpush1.bf16.msra.mxu0 %v1078
    %1429 = vmatprep.subr.bf16.mxu0 %v1075
    %1430 = vmatpush1.bf16.msra.mxu0 %v1074
    %1431 = vmatprep.subr.bf16.mxu0 %v1071
    %1432 = vmatpush1.bf16.msra.mxu0 %v1070
    %1433 = vmatprep.subr.bf16.mxu0 %v1067
    %1434 = vmatpush1.bf16.msra.mxu0 %v1066
    %1435 = vmatprep.subr.bf16.mxu0 %v1063
    %1436 = vmatpush1.bf16.msra.mxu0 %v1062
    %1437 = vmatprep.subr.bf16.mxu0 %v1059
    %1438 = vmatpush1.bf16.msra.mxu0 %v1058
    %1439 = vmatprep.subr.bf16.mxu0 %v1055
    %1440 = vmatpush1.bf16.msra.mxu0 %v1054
    %1441 = vmatprep.subr.bf16.mxu0 %v1051
    %1442 = vmatpush1.bf16.msra.mxu0 %v1050
    %1443 = vmatprep.subr.bf16.mxu0 %v1111
    %1444 = vmatpush2.bf16.msra.mxu0 %v1110
    %1445 = vmatprep.subr.bf16.mxu0 %v1107
    %1446 = vmatpush2.bf16.msra.mxu0 %v1106
    %1447 = vmatprep.subr.bf16.mxu0 %v1103
    %1448 = vmatpush2.bf16.msra.mxu0 %v1102
    %1449 = vmatprep.subr.bf16.mxu0 %v1099
    %1450 = vmatpush2.bf16.msra.mxu0 %v1098
    %1451 = vmatprep.subr.bf16.mxu0 %v1095
    %1452 = vmatpush2.bf16.msra.mxu0 %v1094
    %1453 = vmatprep.subr.bf16.mxu0 %v1091
    %1454 = vmatpush2.bf16.msra.mxu0 %v1090
    %1455 = vmatprep.subr.bf16.mxu0 %v1087
    %1456 = vmatpush2.bf16.msra.mxu0 %v1086
    %1457 = vmatprep.subr.bf16.mxu0 %v1083
    %1458 = vmatpush2.bf16.msra.mxu0 %v1082
    %1459 = vmatprep.mubr.bf16.mxu0 %v107
    %1460 = vmatmul.mubr.bf16.gmra.mxu0 %v106
    %v1461 = vpop.f32.mrf.mxu0
    %v1462 = vadd.f32 %v1409, %v1461
    %v1463 = vpop.f32.mrf.mxu0
    %v1464 = vadd.f32 %v1411, %v1463
    %v1465 = vpop.f32.mrf.mxu0
    %v1466 = vadd.f32 %v1413, %v1465
    %v1467 = vpop.f32.mrf.mxu0
    %v1468 = vadd.f32 %v1415, %v1467
    %1469 = vmatprep.mubr.bf16.mxu0 %v114
    %1470 = vmatmul.mubr.bf16.gmra.mxu0 %v113
    %v1471 = vpop.f32.mrf.mxu0
    %v1472 = vadd.f32 %v1419, %v1471
    %v1473 = vpop.f32.mrf.mxu0
    %v1474 = vadd.f32 %v1421, %v1473
    %v1475 = vpop.f32.mrf.mxu0
    %v1476 = vadd.f32 %v1423, %v1475
    %v1477 = vpop.f32.mrf.mxu0
    %v1478 = vadd.f32 %v1425, %v1477
    %1479 = vdwg.mxu0
    %1480 = vmatprep.subr.bf16.mxu0 0
    %1481 = vmatpush1.bf16.msra.mxu0 0
    %1482 = vmatprep.subr.bf16.mxu0 0
    %1483 = vmatpush1.bf16.msra.mxu0 0
    %1484 = vmatprep.subr.bf16.mxu0 0
    %1485 = vmatpush1.bf16.msra.mxu0 0
    %1486 = vmatprep.subr.bf16.mxu0 0
    %1487 = vmatpush1.bf16.msra.mxu0 0
    %1488 = vmatprep.subr.bf16.mxu0 0
    %1489 = vmatpush1.bf16.msra.mxu0 0
    %1490 = vmatprep.subr.bf16.mxu0 0
    %1491 = vmatpush1.bf16.msra.mxu0 0
    %1492 = vmatprep.subr.bf16.mxu0 0
    %1493 = vmatpush1.bf16.msra.mxu0 0
    %1494 = vmatprep.subr.bf16.mxu0 %v1115
    %1495 = vmatpush1.bf16.msra.mxu0 %v1114
    %1496 = vmatprep.subr.bf16.mxu0 0
    %1497 = vmatpush2.bf16.msra.mxu0 0
    %1498 = vmatprep.subr.bf16.mxu0 0
    %1499 = vmatpush2.bf16.msra.mxu0 0
    %1500 = vmatprep.subr.bf16.mxu0 0
    %1501 = vmatpush2.bf16.msra.mxu0 0
    %1502 = vmatprep.subr.bf16.mxu0 0
    %1503 = vmatpush2.bf16.msra.mxu0 0
    %1504 = vmatprep.subr.bf16.mxu0 0
    %1505 = vmatpush2.bf16.msra.mxu0 0
    %1506 = vmatprep.subr.bf16.mxu0 0
    %1507 = vmatpush2.bf16.msra.mxu0 0
    %1508 = vmatprep.subr.bf16.mxu0 0
    %1509 = vmatpush2.bf16.msra.mxu0 0
    %1510 = vmatprep.subr.bf16.mxu0 0
    %1511 = vmatpush2.bf16.msra.mxu0 0
    %1512 = vmatprep.mubr.bf16.mxu0 0
    %1513 = vmatmul.mubr.bf16.gmra.mxu0 %v1316
    %v1514 = vpop.f32.mrf.mxu0
    %v1515 = vadd.f32 %v1462, %v1514
    %v1516 = vpop.f32.mrf.mxu0
    %v1517 = vadd.f32 %v1464, %v1516
    %v1518 = vpop.f32.mrf.mxu0
    %v1519 = vadd.f32 %v1466, %v1518
    %v1520 = vpop.f32.mrf.mxu0
    %v1521 = vadd.f32 %v1468, %v1520
    %1522 = vmatprep.mubr.bf16.mxu0 0
    %1523 = vmatmul.mubr.bf16.gmra.mxu0 %v1319
    %v1524 = vpop.f32.mrf.mxu0
    %v1525 = vadd.f32 %v1472, %v1524
    %v1526 = vpop.f32.mrf.mxu0
    %v1527 = vadd.f32 %v1474, %v1526
    %v1528 = vpop.f32.mrf.mxu0
    %v1529 = vadd.f32 %v1476, %v1528
    %v1530 = vpop.f32.mrf.mxu0
    %v1531 = vadd.f32 %v1478, %v1530
    %1532 = vdwg.mxu0
    %1533 = vmatprep.subr.bf16.mxu0 %v953
    %1534 = vmatpush1.bf16.msra.mxu0 %v952
    %1535 = vmatprep.subr.bf16.mxu0 %v949
    %1536 = vmatpush1.bf16.msra.mxu0 %v948
    %1537 = vmatprep.subr.bf16.mxu0 %v945
    %1538 = vmatpush1.bf16.msra.mxu0 %v944
    %1539 = vmatprep.subr.bf16.mxu0 %v941
    %1540 = vmatpush1.bf16.msra.mxu0 %v940
    %1541 = vmatprep.subr.bf16.mxu0 %v937
    %1542 = vmatpush1.bf16.msra.mxu0 %v936
    %1543 = vmatprep.subr.bf16.mxu0 %v933
    %1544 = vmatpush1.bf16.msra.mxu0 %v932
    %1545 = vmatprep.subr.bf16.mxu0 %v929
    %1546 = vmatpush1.bf16.msra.mxu0 %v928
    %1547 = vmatprep.subr.bf16.mxu0 %v925
    %1548 = vmatpush1.bf16.msra.mxu0 %v924
    %1549 = vmatprep.subr.bf16.mxu0 %v985
    %1550 = vmatpush2.bf16.msra.mxu0 %v984
    %1551 = vmatprep.subr.bf16.mxu0 %v981
    %1552 = vmatpush2.bf16.msra.mxu0 %v980
    %1553 = vmatprep.subr.bf16.mxu0 %v977
    %1554 = vmatpush2.bf16.msra.mxu0 %v976
    %1555 = vmatprep.subr.bf16.mxu0 %v973
    %1556 = vmatpush2.bf16.msra.mxu0 %v972
    %1557 = vmatprep.subr.bf16.mxu0 %v969
    %1558 = vmatpush2.bf16.msra.mxu0 %v968
    %1559 = vmatprep.subr.bf16.mxu0 %v965
    %1560 = vmatpush2.bf16.msra.mxu0 %v964
    %1561 = vmatprep.subr.bf16.mxu0 %v961
    %1562 = vmatpush2.bf16.msra.mxu0 %v960
    %1563 = vmatprep.subr.bf16.mxu0 %v957
    %1564 = vmatpush2.bf16.msra.mxu0 %v956
    %1565 = vmatprep.mubr.bf16.mxu0 %v103
    %1566 = vmatmul.mubr.bf16.gmra.mxu0 %v102
    %v1567 = vpop.f32.mrf.mxu0
    %v1568 = vadd.f32 %v325, %v1567
    %v1569 = vpop.f32.mrf.mxu0
    %v1570 = vadd.f32 %v329, %v1569
    %v1571 = vpop.f32.mrf.mxu0
    %v1572 = vadd.f32 %v325, %v1571
    %v1573 = vpop.f32.mrf.mxu0
    %v1574 = vadd.f32 %v329, %v1573
    %1575 = vmatprep.mubr.bf16.mxu0 %v110
    %1576 = vmatmul.mubr.bf16.gmra.mxu0 %v109
    %v1577 = vpop.f32.mrf.mxu0
    %v1578 = vadd.f32 %v325, %v1577
    %v1579 = vpop.f32.mrf.mxu0
    %v1580 = vadd.f32 %v329, %v1579
    %v1581 = vpop.f32.mrf.mxu0
    %v1582 = vadd.f32 %v325, %v1581
    %v1583 = vpop.f32.mrf.mxu0
    %v1584 = vadd.f32 %v329, %v1583
    %1585 = vdwg.mxu0
    %1586 = vmatprep.subr.bf16.mxu0 %v1017
    %1587 = vmatpush1.bf16.msra.mxu0 %v1016
    %1588 = vmatprep.subr.bf16.mxu0 %v1013
    %1589 = vmatpush1.bf16.msra.mxu0 %v1012
    %1590 = vmatprep.subr.bf16.mxu0 %v1009
    %1591 = vmatpush1.bf16.msra.mxu0 %v1008
    %1592 = vmatprep.subr.bf16.mxu0 %v1005
    %1593 = vmatpush1.bf16.msra.mxu0 %v1004
    %1594 = vmatprep.subr.bf16.mxu0 %v1001
    %1595 = vmatpush1.bf16.msra.mxu0 %v1000
    %1596 = vmatprep.subr.bf16.mxu0 %v997
    %1597 = vmatpush1.bf16.msra.mxu0 %v996
    %1598 = vmatprep.subr.bf16.mxu0 %v993
    %1599 = vmatpush1.bf16.msra.mxu0 %v992
    %1600 = vmatprep.subr.bf16.mxu0 %v989
    %1601 = vmatpush1.bf16.msra.mxu0 %v988
    %1602 = vmatprep.subr.bf16.mxu0 %v1049
    %1603 = vmatpush2.bf16.msra.mxu0 %v1048
    %1604 = vmatprep.subr.bf16.mxu0 %v1045
    %1605 = vmatpush2.bf16.msra.mxu0 %v1044
    %1606 = vmatprep.subr.bf16.mxu0 %v1041
    %1607 = vmatpush2.bf16.msra.mxu0 %v1040
    %1608 = vmatprep.subr.bf16.mxu0 %v1037
    %1609 = vmatpush2.bf16.msra.mxu0 %v1036
    %1610 = vmatprep.subr.bf16.mxu0 %v1033
    %1611 = vmatpush2.bf16.msra.mxu0 %v1032
    %1612 = vmatprep.subr.bf16.mxu0 %v1029
    %1613 = vmatpush2.bf16.msra.mxu0 %v1028
    %1614 = vmatprep.subr.bf16.mxu0 %v1025
    %1615 = vmatpush2.bf16.msra.mxu0 %v1024
    %1616 = vmatprep.subr.bf16.mxu0 %v1021
    %1617 = vmatpush2.bf16.msra.mxu0 %v1020
    %1618 = vmatprep.mubr.bf16.mxu0 %v105
    %1619 = vmatmul.mubr.bf16.gmra.mxu0 %v104
    %v1620 = vpop.f32.mrf.mxu0
    %v1621 = vadd.f32 %v1568, %v1620
    %v1622 = vpop.f32.mrf.mxu0
    %v1623 = vadd.f32 %v1570, %v1622
    %v1624 = vpop.f32.mrf.mxu0
    %v1625 = vadd.f32 %v1572, %v1624
    %v1626 = vpop.f32.mrf.mxu0
    %v1627 = vadd.f32 %v1574, %v1626
    %1628 = vmatprep.mubr.bf16.mxu0 %v112
    %1629 = vmatmul.mubr.bf16.gmra.mxu0 %v111
    %v1630 = vpop.f32.mrf.mxu0
    %v1631 = vadd.f32 %v1578, %v1630
    %v1632 = vpop.f32.mrf.mxu0
    %v1633 = vadd.f32 %v1580, %v1632
    %v1634 = vpop.f32.mrf.mxu0
    %v1635 = vadd.f32 %v1582, %v1634
    %v1636 = vpop.f32.mrf.mxu0
    %v1637 = vadd.f32 %v1584, %v1636
    %1638 = vdwg.mxu0
    %1639 = vmatprep.subr.bf16.mxu0 %v1081
    %1640 = vmatpush1.bf16.msra.mxu0 %v1080
    %1641 = vmatprep.subr.bf16.mxu0 %v1077
    %1642 = vmatpush1.bf16.msra.mxu0 %v1076
    %1643 = vmatprep.subr.bf16.mxu0 %v1073
    %1644 = vmatpush1.bf16.msra.mxu0 %v1072
    %1645 = vmatprep.subr.bf16.mxu0 %v1069
    %1646 = vmatpush1.bf16.msra.mxu0 %v1068
    %1647 = vmatprep.subr.bf16.mxu0 %v1065
    %1648 = vmatpush1.bf16.msra.mxu0 %v1064
    %1649 = vmatprep.subr.bf16.mxu0 %v1061
    %1650 = vmatpush1.bf16.msra.mxu0 %v1060
    %1651 = vmatprep.subr.bf16.mxu0 %v1057
    %1652 = vmatpush1.bf16.msra.mxu0 %v1056
    %1653 = vmatprep.subr.bf16.mxu0 %v1053
    %1654 = vmatpush1.bf16.msra.mxu0 %v1052
    %1655 = vmatprep.subr.bf16.mxu0 %v1113
    %1656 = vmatpush2.bf16.msra.mxu0 %v1112
    %1657 = vmatprep.subr.bf16.mxu0 %v1109
    %1658 = vmatpush2.bf16.msra.mxu0 %v1108
    %1659 = vmatprep.subr.bf16.mxu0 %v1105
    %1660 = vmatpush2.bf16.msra.mxu0 %v1104
    %1661 = vmatprep.subr.bf16.mxu0 %v1101
    %1662 = vmatpush2.bf16.msra.mxu0 %v1100
    %1663 = vmatprep.subr.bf16.mxu0 %v1097
    %1664 = vmatpush2.bf16.msra.mxu0 %v1096
    %1665 = vmatprep.subr.bf16.mxu0 %v1093
    %1666 = vmatpush2.bf16.msra.mxu0 %v1092
    %1667 = vmatprep.subr.bf16.mxu0 %v1089
    %1668 = vmatpush2.bf16.msra.mxu0 %v1088
    %1669 = vmatprep.subr.bf16.mxu0 %v1085
    %1670 = vmatpush2.bf16.msra.mxu0 %v1084
    %1671 = vmatprep.mubr.bf16.mxu0 %v107
    %1672 = vmatmul.mubr.bf16.gmra.mxu0 %v106
    %v1673 = vpop.f32.mrf.mxu0
    %v1674 = vadd.f32 %v1621, %v1673
    %v1675 = vpop.f32.mrf.mxu0
    %v1676 = vadd.f32 %v1623, %v1675
    %v1677 = vpop.f32.mrf.mxu0
    %v1678 = vadd.f32 %v1625, %v1677
    %v1679 = vpop.f32.mrf.mxu0
    %v1680 = vadd.f32 %v1627, %v1679
    %1681 = vmatprep.mubr.bf16.mxu0 %v114
    %1682 = vmatmul.mubr.bf16.gmra.mxu0 %v113
    %v1683 = vpop.f32.mrf.mxu0
    %v1684 = vadd.f32 %v1631, %v1683
    %v1685 = vpop.f32.mrf.mxu0
    %v1686 = vadd.f32 %v1633, %v1685
    %v1687 = vpop.f32.mrf.mxu0
    %v1688 = vadd.f32 %v1635, %v1687
    %v1689 = vpop.f32.mrf.mxu0
    %v1690 = vadd.f32 %v1637, %v1689
    %1691 = vdwg.mxu0
    %1692 = vmatprep.subr.bf16.mxu0 0
    %1693 = vmatpush1.bf16.msra.mxu0 0
    %1694 = vmatprep.subr.bf16.mxu0 0
    %1695 = vmatpush1.bf16.msra.mxu0 0
    %1696 = vmatprep.subr.bf16.mxu0 0
    %1697 = vmatpush1.bf16.msra.mxu0 0
    %1698 = vmatprep.subr.bf16.mxu0 0
    %1699 = vmatpush1.bf16.msra.mxu0 0
    %1700 = vmatprep.subr.bf16.mxu0 0
    %1701 = vmatpush1.bf16.msra.mxu0 0
    %1702 = vmatprep.subr.bf16.mxu0 0
    %1703 = vmatpush1.bf16.msra.mxu0 0
    %1704 = vmatprep.subr.bf16.mxu0 0
    %1705 = vmatpush1.bf16.msra.mxu0 0
    %1706 = vmatprep.subr.bf16.mxu0 %v1117
    %1707 = vmatpush1.bf16.msra.mxu0 %v1116
    %1708 = vmatprep.subr.bf16.mxu0 0
    %1709 = vmatpush2.bf16.msra.mxu0 0
    %1710 = vmatprep.subr.bf16.mxu0 0
    %1711 = vmatpush2.bf16.msra.mxu0 0
    %1712 = vmatprep.subr.bf16.mxu0 0
    %1713 = vmatpush2.bf16.msra.mxu0 0
    %1714 = vmatprep.subr.bf16.mxu0 0
    %1715 = vmatpush2.bf16.msra.mxu0 0
    %1716 = vmatprep.subr.bf16.mxu0 0
    %1717 = vmatpush2.bf16.msra.mxu0 0
    %1718 = vmatprep.subr.bf16.mxu0 0
    %1719 = vmatpush2.bf16.msra.mxu0 0
    %1720 = vmatprep.subr.bf16.mxu0 0
    %1721 = vmatpush2.bf16.msra.mxu0 0
    %1722 = vmatprep.subr.bf16.mxu0 0
    %1723 = vmatpush2.bf16.msra.mxu0 0
    %1724 = vmatprep.mubr.bf16.mxu0 0
    %1725 = vmatmul.mubr.bf16.gmra.mxu0 %v1316
    %v1726 = vpop.f32.mrf.mxu0
    %v1727 = vadd.f32 %v1674, %v1726
    %v1728 = vpop.f32.mrf.mxu0
    %v1729 = vadd.f32 %v1676, %v1728
    %v1730 = vpop.f32.mrf.mxu0
    %v1731 = vadd.f32 %v1678, %v1730
    %v1732 = vpop.f32.mrf.mxu0
    %v1733 = vadd.f32 %v1680, %v1732
    %1734 = vmatprep.mubr.bf16.mxu0 0
    %1735 = vmatmul.mubr.bf16.gmra.mxu0 %v1319
    %v1736 = vpop.f32.mrf.mxu0
    %v1737 = vadd.f32 %v1684, %v1736
    %v1738 = vpop.f32.mrf.mxu0
    %v1739 = vadd.f32 %v1686, %v1738
    %v1740 = vpop.f32.mrf.mxu0
    %v1741 = vadd.f32 %v1688, %v1740
    %v1742 = vpop.f32.mrf.mxu0
    %v1743 = vadd.f32 %v1690, %v1742
    %1744 = vdwg.mxu0
    %v1745 = vmax.f32 %v1515, 0.0
    %v1746 = vmax.f32 %v1517, 0.0
    %v1747 = vmax.f32 %v1727, 0.0
    %v1748 = vmax.f32 %v1729, 0.0
    %v1749 = vmax.f32 %v1519, 0.0
    %v1750 = vmax.f32 %v1521, 0.0
    %v1751 = vmax.f32 %v1731, 0.0
    %v1752 = vmax.f32 %v1733, 0.0
    %v1753 = vmax.f32 %v1525, 0.0
    %v1754 = vmax.f32 %v1527, 0.0
    %v1755 = vmax.f32 %v1737, 0.0
    %v1756 = vmax.f32 %v1739, 0.0
    %v1757 = vmax.f32 %v1529, 0.0
    %v1758 = vmax.f32 %v1531, 0.0
    %v1759 = vmax.f32 %v1741, 0.0
    %v1760 = vmax.f32 %v1743, 0.0
    %v1761 = vpack.c.bf16 %v1749, %v1745
    %v1762 = vpack.c.bf16 %v1750, %v1746
    %v1763 = vpack.c.bf16 %v1751, %v1747
    %v1764 = vpack.c.bf16 %v1752, %v1748
    %v1765 = vpack.c.bf16 %v1757, %v1753
    %v1766 = vpack.c.bf16 %v1758, %v1754
    %v1767 = vpack.c.bf16 %v1759, %v1755
    %v1768 = vpack.c.bf16 %v1760, %v1756
    %v1769 = vld [vmem:[#allocation7] sm:$0xf]
    %v1770 = vld [vmem:[#allocation7 + $0x4] sm:$0xf]
    %v1771 = vld [vmem:[#allocation7 + $0x8] sm:$0xf]
    %v1772 = vld [vmem:[#allocation7 + $0xc] sm:$0xf]
    %v1773 = vld [vmem:[#allocation7 + $0x10] sm:$0xf]
    %v1774 = vld [vmem:[#allocation7 + $0x14] sm:$0xf]
    %v1775 = vld [vmem:[#allocation7 + $0x18] sm:$0xf]
    %v1776 = vld [vmem:[#allocation7 + $0x1c] sm:$0xf]
    %v1777 = vld [vmem:[#allocation7 + $0x20] sm:$0xf]
    %v1778 = vld [vmem:[#allocation7 + $0x24] sm:$0xf]
    %v1779 = vld [vmem:[#allocation7 + $0x28] sm:$0xf]
    %v1780 = vld [vmem:[#allocation7 + $0x2c] sm:$0xf]
    %v1781 = vld [vmem:[#allocation7 + $0x30] sm:$0xf]
    %v1782 = vld [vmem:[#allocation7 + $0x34] sm:$0xf]
    %v1783 = vld [vmem:[#allocation7 + $0x38] sm:$0xf]
    %v1784 = vld [vmem:[#allocation7 + $0x3c] sm:$0xf]
    %v1785 = vld [vmem:[#allocation7 + $0x40] sm:$0xf]
    %v1786 = vld [vmem:[#allocation7 + $0x44] sm:$0xf]
    %v1787 = vld [vmem:[#allocation7 + $0x48] sm:$0xf]
    %v1788 = vld [vmem:[#allocation7 + $0x4c] sm:$0xf]
    %v1789 = vld [vmem:[#allocation7 + $0x50] sm:$0xf]
    %v1790 = vld [vmem:[#allocation7 + $0x54] sm:$0xf]
    %v1791 = vld [vmem:[#allocation7 + $0x58] sm:$0xf]
    %v1792 = vld [vmem:[#allocation7 + $0x5c] sm:$0xf]
    %v1793 = vld [vmem:[#allocation7 + $0x60] sm:$0xf]
    %v1794 = vld [vmem:[#allocation7 + $0x64] sm:$0xf]
    %v1795 = vld [vmem:[#allocation7 + $0x68] sm:$0xf]
    %v1796 = vld [vmem:[#allocation7 + $0x6c] sm:$0xf]
    %v1797 = vld [vmem:[#allocation7 + $0x70] sm:$0xf]
    %v1798 = vld [vmem:[#allocation7 + $0x74] sm:$0xf]
    %v1799 = vld [vmem:[#allocation7 + $0x78] sm:$0xf]
    %v1800 = vld [vmem:[#allocation7 + $0x7c] sm:$0xf]
    %v1801 = vld [vmem:[#allocation7 + $0x80] sm:$0xf]
    %v1802 = vld [vmem:[#allocation7 + $0x84] sm:$0xf]
    %v1803 = vld [vmem:[#allocation7 + $0x88] sm:$0xf]
    %v1804 = vld [vmem:[#allocation7 + $0x8c] sm:$0xf]
    %v1805 = vld [vmem:[#allocation7 + $0x90] sm:$0xf]
    %v1806 = vld [vmem:[#allocation7 + $0x94] sm:$0xf]
    %v1807 = vld [vmem:[#allocation7 + $0x98] sm:$0xf]
    %v1808 = vld [vmem:[#allocation7 + $0x9c] sm:$0xf]
    %v1809 = vld [vmem:[#allocation7 + $0xa0] sm:$0xf]
    %v1810 = vld [vmem:[#allocation7 + $0xa4] sm:$0xf]
    %v1811 = vld [vmem:[#allocation7 + $0xa8] sm:$0xf]
    %v1812 = vld [vmem:[#allocation7 + $0xac] sm:$0xf]
    %v1813 = vld [vmem:[#allocation7 + $0xb0] sm:$0xf]
    %v1814 = vld [vmem:[#allocation7 + $0xb4] sm:$0xf]
    %v1815 = vld [vmem:[#allocation7 + $0xb8] sm:$0xf]
    %v1816 = vld [vmem:[#allocation7 + $0xbc] sm:$0xf]
    %v1817 = vld [vmem:[#allocation7 + $0xc0] sm:$0xf]
    %v1818 = vld [vmem:[#allocation7 + $0xc4] sm:$0xf]
    %v1819 = vld [vmem:[#allocation7 + $0xc8] sm:$0xf]
    %v1820 = vld [vmem:[#allocation7 + $0xcc] sm:$0xf]
    %v1821 = vld [vmem:[#allocation7 + $0xd0] sm:$0xf]
    %v1822 = vld [vmem:[#allocation7 + $0xd4] sm:$0xf]
    %v1823 = vld [vmem:[#allocation7 + $0xd8] sm:$0xf]
    %v1824 = vld [vmem:[#allocation7 + $0xdc] sm:$0xf]
    %v1825 = vld [vmem:[#allocation7 + $0xe0] sm:$0xf]
    %v1826 = vld [vmem:[#allocation7 + $0xe4] sm:$0xf]
    %v1827 = vld [vmem:[#allocation7 + $0xe8] sm:$0xf]
    %v1828 = vld [vmem:[#allocation7 + $0xec] sm:$0xf]
    %v1829 = vld [vmem:[#allocation7 + $0xf0] sm:$0xf]
    %v1830 = vld [vmem:[#allocation7 + $0xf4] sm:$0xf]
    %v1831 = vld [vmem:[#allocation7 + $0xf8] sm:$0xf]
    %v1832 = vld [vmem:[#allocation7 + $0xfc] sm:$0xf]
    %v1833 = vld [vmem:[%s4] sm:$0x1]
    %v1835 = vlaneseq
    %v1836 = vshrl.u32 %v1835, 7
    %v1837 = vsub.s32 0, %v1836
    %v1838 = vrot.slane %v1833, %v1837
    %v1904 = vunpack.c.l.b16 %v1769
    %v1905 = vunpack.c.l.b16 %v1770
    %v1906 = vunpack.c.l.b16 %v1771
    %v1907 = vunpack.c.l.b16 %v1772
    %v1908 = vunpack.c.l.b16 %v1773
    %v1909 = vunpack.c.l.b16 %v1774
    %v1910 = vunpack.c.l.b16 %v1775
    %v1911 = vunpack.c.l.b16 %v1776
    %v1912 = vunpack.c.l.b16 %v1777
    %v1913 = vunpack.c.l.b16 %v1778
    %v1914 = vunpack.c.l.b16 %v1779
    %v1915 = vunpack.c.l.b16 %v1780
    %v1916 = vunpack.c.l.b16 %v1781
    %v1917 = vunpack.c.l.b16 %v1782
    %v1918 = vunpack.c.l.b16 %v1783
    %v1919 = vunpack.c.l.b16 %v1784
    %v1920 = vunpack.c.l.b16 %v1785
    %v1921 = vunpack.c.l.b16 %v1786
    %v1922 = vunpack.c.l.b16 %v1787
    %v1923 = vunpack.c.l.b16 %v1788
    %v1924 = vunpack.c.l.b16 %v1789
    %v1925 = vunpack.c.l.b16 %v1790
    %v1926 = vunpack.c.l.b16 %v1791
    %v1927 = vunpack.c.l.b16 %v1792
    %v1928 = vunpack.c.l.b16 %v1793
    %v1929 = vunpack.c.l.b16 %v1794
    %v1930 = vunpack.c.l.b16 %v1795
    %v1931 = vunpack.c.l.b16 %v1796
    %v1932 = vunpack.c.l.b16 %v1797
    %v1933 = vunpack.c.l.b16 %v1798
    %v1934 = vunpack.c.l.b16 %v1799
    %v1935 = vunpack.c.l.b16 %v1800
    %v1936 = vunpack.c.l.b16 %v1801
    %v1937 = vunpack.c.l.b16 %v1802
    %v1938 = vunpack.c.l.b16 %v1803
    %v1939 = vunpack.c.l.b16 %v1804
    %v1940 = vunpack.c.l.b16 %v1805
    %v1941 = vunpack.c.l.b16 %v1806
    %v1942 = vunpack.c.l.b16 %v1807
    %v1943 = vunpack.c.l.b16 %v1808
    %v1944 = vunpack.c.l.b16 %v1809
    %v1945 = vunpack.c.l.b16 %v1810
    %v1946 = vunpack.c.l.b16 %v1811
    %v1947 = vunpack.c.l.b16 %v1812
    %v1948 = vunpack.c.l.b16 %v1813
    %v1949 = vunpack.c.l.b16 %v1814
    %v1950 = vunpack.c.l.b16 %v1815
    %v1951 = vunpack.c.l.b16 %v1816
    %v1952 = vunpack.c.l.b16 %v1817
    %v1953 = vunpack.c.l.b16 %v1818
    %v1954 = vunpack.c.l.b16 %v1819
    %v1955 = vunpack.c.l.b16 %v1820
    %v1956 = vunpack.c.l.b16 %v1821
    %v1957 = vunpack.c.l.b16 %v1822
    %v1958 = vunpack.c.l.b16 %v1823
    %v1959 = vunpack.c.l.b16 %v1824
    %v1960 = vunpack.c.l.b16 %v1825
    %v1961 = vunpack.c.l.b16 %v1826
    %v1962 = vunpack.c.l.b16 %v1827
    %v1963 = vunpack.c.l.b16 %v1828
    %v1964 = vunpack.c.l.b16 %v1829
    %v1965 = vunpack.c.l.b16 %v1830
    %v1966 = vunpack.c.l.b16 %v1831
    %v1967 = vunpack.c.l.b16 %v1832
    %v1968 = vpack.c.b16 %v1905, %v1904
    %v1969 = vpack.c.b16 %v1907, %v1906
    %v1970 = vpack.c.b16 %v1909, %v1908
    %v1971 = vpack.c.b16 %v1911, %v1910
    %v1972 = vpack.c.b16 %v1913, %v1912
    %v1973 = vpack.c.b16 %v1915, %v1914
    %v1974 = vpack.c.b16 %v1917, %v1916
    %v1975 = vpack.c.b16 %v1919, %v1918
    %v1976 = vpack.c.b16 %v1921, %v1920
    %v1977 = vpack.c.b16 %v1923, %v1922
    %v1978 = vpack.c.b16 %v1925, %v1924
    %v1979 = vpack.c.b16 %v1927, %v1926
    %v1980 = vpack.c.b16 %v1929, %v1928
    %v1981 = vpack.c.b16 %v1931, %v1930
    %v1982 = vpack.c.b16 %v1933, %v1932
    %v1983 = vpack.c.b16 %v1935, %v1934
    %v1984 = vpack.c.b16 %v1937, %v1936
    %v1985 = vpack.c.b16 %v1939, %v1938
    %v1986 = vpack.c.b16 %v1941, %v1940
    %v1987 = vpack.c.b16 %v1943, %v1942
    %v1988 = vpack.c.b16 %v1945, %v1944
    %v1989 = vpack.c.b16 %v1947, %v1946
    %v1990 = vpack.c.b16 %v1949, %v1948
    %v1991 = vpack.c.b16 %v1951, %v1950
    %v1992 = vpack.c.b16 %v1953, %v1952
    %v1993 = vpack.c.b16 %v1955, %v1954
    %v1994 = vpack.c.b16 %v1957, %v1956
    %v1995 = vpack.c.b16 %v1959, %v1958
    %v1996 = vpack.c.b16 %v1961, %v1960
    %v1997 = vpack.c.b16 %v1963, %v1962
    %v1998 = vpack.c.b16 %v1965, %v1964
    %v1999 = vpack.c.b16 %v1967, %v1966
    %2032 = vmatprep.subr.bf16.mxu0 0
    %2033 = vmatpush1.bf16.msra.mxu0 %v1975
    %2034 = vmatprep.subr.bf16.mxu0 0
    %2035 = vmatpush1.bf16.msra.mxu0 %v1974
    %2036 = vmatprep.subr.bf16.mxu0 0
    %2037 = vmatpush1.bf16.msra.mxu0 %v1973
    %2038 = vmatprep.subr.bf16.mxu0 0
    %2039 = vmatpush1.bf16.msra.mxu0 %v1972
    %2040 = vmatprep.subr.bf16.mxu0 0
    %2041 = vmatpush1.bf16.msra.mxu0 %v1971
    %2042 = vmatprep.subr.bf16.mxu0 0
    %2043 = vmatpush1.bf16.msra.mxu0 %v1970
    %2044 = vmatprep.subr.bf16.mxu0 0
    %2045 = vmatpush1.bf16.msra.mxu0 %v1969
    %2046 = vmatprep.subr.bf16.mxu0 0
    %2047 = vmatpush1.bf16.msra.mxu0 %v1968
    %2048 = vmatprep.subr.bf16.mxu0 0
    %2049 = vmatpush2.bf16.msra.mxu0 %v1983
    %2050 = vmatprep.subr.bf16.mxu0 0
    %2051 = vmatpush2.bf16.msra.mxu0 %v1982
    %2052 = vmatprep.subr.bf16.mxu0 0
    %2053 = vmatpush2.bf16.msra.mxu0 %v1981
    %2054 = vmatprep.subr.bf16.mxu0 0
    %2055 = vmatpush2.bf16.msra.mxu0 %v1980
    %2056 = vmatprep.subr.bf16.mxu0 0
    %2057 = vmatpush2.bf16.msra.mxu0 %v1979
    %2058 = vmatprep.subr.bf16.mxu0 0
    %2059 = vmatpush2.bf16.msra.mxu0 %v1978
    %2060 = vmatprep.subr.bf16.mxu0 0
    %2061 = vmatpush2.bf16.msra.mxu0 %v1977
    %2062 = vmatprep.subr.bf16.mxu0 0
    %2063 = vmatpush2.bf16.msra.mxu0 %v1976
    %2064 = vmatprep.mubr.bf16.mxu0 %v1762
    %2065 = vmatmul.mubr.bf16.gmra.mxu0 %v1761
    %v2066 = vpop.f32.mrf.mxu0
    %v2067 = vadd.f32 %v1838, %v2066
    %v2068 = vpop.f32.mrf.mxu0
    %v2069 = vpop.f32.mrf.mxu0
    %v2070 = vadd.f32 %v1838, %v2069
    %v2071 = vpop.f32.mrf.mxu0
    %2072 = vmatprep.mubr.bf16.mxu0 %v1766
    %2073 = vmatmul.mubr.bf16.gmra.mxu0 %v1765
    %v2074 = vpop.f32.mrf.mxu0
    %v2075 = vadd.f32 %v1838, %v2074
    %v2076 = vpop.f32.mrf.mxu0
    %v2077 = vpop.f32.mrf.mxu0
    %v2078 = vadd.f32 %v1838, %v2077
    %v2079 = vpop.f32.mrf.mxu0
    %2080 = vdwg.mxu0
    %2081 = vmatprep.subr.bf16.mxu0 0
    %2082 = vmatpush1.bf16.msra.mxu0 %v1991
    %2083 = vmatprep.subr.bf16.mxu0 0
    %2084 = vmatpush1.bf16.msra.mxu0 %v1990
    %2085 = vmatprep.subr.bf16.mxu0 0
    %2086 = vmatpush1.bf16.msra.mxu0 %v1989
    %2087 = vmatprep.subr.bf16.mxu0 0
    %2088 = vmatpush1.bf16.msra.mxu0 %v1988
    %2089 = vmatprep.subr.bf16.mxu0 0
    %2090 = vmatpush1.bf16.msra.mxu0 %v1987
    %2091 = vmatprep.subr.bf16.mxu0 0
    %2092 = vmatpush1.bf16.msra.mxu0 %v1986
    %2093 = vmatprep.subr.bf16.mxu0 0
    %2094 = vmatpush1.bf16.msra.mxu0 %v1985
    %2095 = vmatprep.subr.bf16.mxu0 0
    %2096 = vmatpush1.bf16.msra.mxu0 %v1984
    %2097 = vmatprep.subr.bf16.mxu0 0
    %2098 = vmatpush2.bf16.msra.mxu0 %v1999
    %2099 = vmatprep.subr.bf16.mxu0 0
    %2100 = vmatpush2.bf16.msra.mxu0 %v1998
    %2101 = vmatprep.subr.bf16.mxu0 0
    %2102 = vmatpush2.bf16.msra.mxu0 %v1997
    %2103 = vmatprep.subr.bf16.mxu0 0
    %2104 = vmatpush2.bf16.msra.mxu0 %v1996
    %2105 = vmatprep.subr.bf16.mxu0 0
    %2106 = vmatpush2.bf16.msra.mxu0 %v1995
    %2107 = vmatprep.subr.bf16.mxu0 0
    %2108 = vmatpush2.bf16.msra.mxu0 %v1994
    %2109 = vmatprep.subr.bf16.mxu0 0
    %2110 = vmatpush2.bf16.msra.mxu0 %v1993
    %2111 = vmatprep.subr.bf16.mxu0 0
    %2112 = vmatpush2.bf16.msra.mxu0 %v1992
    %2113 = vmatprep.mubr.bf16.mxu0 %v1764
    %2114 = vmatmul.mubr.bf16.gmra.mxu0 %v1763
    %v2115 = vpop.f32.mrf.mxu0
    %v2116 = vadd.f32 %v2067, %v2115
    %v2117 = vpop.f32.mrf.mxu0
    %v2118 = vpop.f32.mrf.mxu0
    %v2119 = vadd.f32 %v2070, %v2118
    %v2120 = vpop.f32.mrf.mxu0
    %2121 = vmatprep.mubr.bf16.mxu0 %v1768
    %2122 = vmatmul.mubr.bf16.gmra.mxu0 %v1767
    %v2123 = vpop.f32.mrf.mxu0
    %v2124 = vadd.f32 %v2075, %v2123
    %v2125 = vpop.f32.mrf.mxu0
    %v2126 = vpop.f32.mrf.mxu0
    %v2127 = vadd.f32 %v2078, %v2126
    %v2128 = vpop.f32.mrf.mxu0
    %2129 = vdwg.mxu0
    %v2130 = vmax.f32 %v2116, 0.0
    %v2131 = vmax.f32 %v2119, 0.0
    %v2132 = vmax.f32 %v2124, 0.0
    %v2133 = vmax.f32 %v2127, 0.0
    %v2134 = vpack.c.bf16 %v2131, %v2130
    %v2135 = vpack.c.bf16 %v2133, %v2132
    %v2138 = vunpack.c.l.b16 %v2134
    %v2139 = vunpack.c.h.b16 %v2134
    %v2140 = vunpack.c.l.b16 %v2135
    %v2141 = vunpack.c.h.b16 %v2135
    %v2142 = vpack.c.b16 %v2138, %v2138
    %v2143 = vpack.c.b16 %v2139, %v2139
    %v2144 = vpack.c.b16 %v2140, %v2140
    %v2145 = vpack.c.b16 %v2141, %v2141
    %2150 = vst [vmem:[%s5] sm:$0xf] %v2142
    %2151 = vst [vmem:[%s5 + $0x4] sm:$0xf] %v2143
    %2152 = vst [vmem:[%s5 + $0x8] sm:$0xf] %v2144
    %2153 = vst [vmem:[%s5 + $0xc] sm:$0xf] %v2145
    // Predicated region
    $region38: #{mlp_forward.1} parent=1 // pred_check
      _
    $region39: #{mlp_forward.1} parent=1 // pred_check_branch
      %2155 = sbr.rel (0) target = $region41
    $region40: #{mlp_forward.1} parent=1 // pred_region
      _
    $region41: #{mlp_forward.1} parent=1 // pred_fallthru
      _
    // Predicated region
    $region42: #{mlp_forward.1} parent=1 // pred_check
      _
    $region43: #{mlp_forward.1} parent=1 // pred_check_branch
      %2157 = sbr.rel (0) target = $region45
    $region44: #{mlp_forward.1} parent=1 // pred_region
      _
    $region45: #{mlp_forward.1} parent=1 // pred_fallthru
      _
    %2158 = vsyncpa [#allocation3], 1
    %2159 = vsyncpa [#allocation5], 1
    %2160 = vsyncpa [#allocation8], 1

</llo_original>
